<compile_context>
chip_gen: v7x
topology: tpu7x:2x2x1
jax: 0.10.0
libtpu: 0.0.40
codegen_flags: <defaults>
</compile_context>

<pallas_src>
import functools

import jax
import jax.numpy as jnp
from jax.experimental import pallas as pl
from jax.experimental.pallas import tpu as pltpu

# ---------------- model dimensions (fixed by the PyTorch module) ----------------
D_HID = 768      # WavLM hidden size
D1 = 512         # first classifier layer
D2 = 128         # second classifier layer
N_CLS = 2        # output classes
N_CLS_PAD = 128  # lane-padded output width inside the kernel


def _round_up(x, m):
    return (x + m - 1) // m * m


def _vmem_limit_bytes():
    # 32 MiB is safe on every generation (v7x has only 64 MiB physical VMEM) and
    # already holds the ~19 MiB working set; take more headroom when available.
    try:
        cap = pltpu.get_tpu_info().vmem_capacity_bytes
        return int(max(32 << 20, min(96 << 20, (cap * 3) // 4)))
    except Exception:
        return 32 << 20


def _head_kernel(need_mask,
                 tvalid_ref,                  # SMEM scalar prefetch: [true frame count]
                 h_ref,                       # (tB, tT, 768) streamed tile, native dtype
                 w1_ref, c1_ref,              # 768->512 linear (bf16) with BN folded in
                 w2_ref, c2_ref,              # 512->128 linear (bf16) with BN folded in
                 w3_ref, b3_ref,              # 128->128 (bf16, zero-padded from 128->2)
                 o_ref,                       # (tB, 128) padded logits (f32)
                 acc_ref):                    # (tB, 768) f32 time-sum accumulator
    t = pl.program_id(1)
    n_t = pl.num_programs(1)
    tT = h_ref.shape[1]

    @pl.when(t == 0)
    def _():
        acc_ref[...] = jnp.zeros_like(acc_ref)

    # Streamed mean pooling: accumulate the time-sum in f32.
    tile = h_ref[...].astype(jnp.float32)
    if need_mask:
        # Zero out frames beyond the true clip length (ragged last tile and/or
        # caller-side length bucketing).  jnp.where (not multiply) so that any
        # garbage/NaN in the out-of-bounds region cannot leak into the sum.
        frame = t * tT + jax.lax.broadcasted_iota(jnp.int32, (1, tT, 1), 1)
        tile = jnp.where(frame < tvalid_ref[0], tile, 0.0)
    acc_ref[...] += jnp.sum(tile, axis=1)

    # Epilogue MLP only on the final T step.
    @pl.when(t == n_t - 1)
    def _():
        inv_t = 1.0 / tvalid_ref[0].astype(jnp.float32)
        pooled = (acc_ref[...] * inv_t).astype(jnp.bfloat16)   # mean over true T
        # Dropout(0.4): identity in eval mode.

        # Linear(768,512) + BatchNorm1d(512)(eval, folded) + ReLU
        x = jnp.maximum(
            jnp.dot(pooled, w1_ref[...], preferred_element_type=jnp.float32)
            + c1_ref[...], 0.0)
        # Dropout(0.3): identity in eval mode.

        # Linear(512,128) + BatchNorm1d(128)(eval, folded) + ReLU
        x = jnp.maximum(
            jnp.dot(x.astype(jnp.bfloat16), w2_ref[...],
                    preferred_element_type=jnp.float32)
            + c2_ref[...], 0.0)
        # Dropout(0.2): identity in eval mode.

        # Linear(128,2), zero-padded to 128 output lanes (lane-dense store).
        o_ref[...] = (jnp.dot(x.astype(jnp.bfloat16), w3_ref[...],
                              preferred_element_type=jnp.float32)
                      + b3_ref[...])


def prepare_head_params(params):
    """Fold eval-mode BatchNorm into the linear layers, pad the final projection to
    128 lanes, and cast the matmul weights to bf16 (MXU-native, halves VMEM/HBM).
    Biases / BN shifts stay f32.  Done once, outside the per-call path."""
    (w1, b1, s1, t1, w2, b2, s2, t2, w3, b3) = params
    w1f = (w1 * s1).astype(jnp.bfloat16)          # scale output columns by BN scale
    c1 = (b1 * s1 + t1).astype(jnp.float32)
    w2f = (w2 * s2).astype(jnp.bfloat16)
    c2 = (b2 * s2 + t2).astype(jnp.float32)
    w3p = jnp.zeros((D2, N_CLS_PAD), jnp.float32).at[:, :N_CLS].set(w3)
    b3p = jnp.zeros((1, N_CLS_PAD), jnp.float32).at[:, :N_CLS].set(b3)
    return (w1f, c1, w2f, c2, w3p.astype(jnp.bfloat16), b3p)


def spoof_detector_head(hidden_states, folded_params, *, valid_len=None,
                        tile_bytes=8 << 20):
    """hidden_states: (B, T, 768) == wavlm(input_values).last_hidden_state (any float
    dtype; streamed as-is, no wrapper-side cast/pad copies).

    valid_len: optional true frame count (<= T) for length-bucketed serving: pad
    hidden_states to a bucket length T and pass the real length here — only the grid
    shape (not the kernel body) depends on the bucket, avoiding per-length retraces.
    """
    B, T, D = hidden_states.shape
    assert D == D_HID
    w1f, c1, w2f, c2, w3p, b3p = folded_params
    itemsize = jnp.dtype(hidden_states.dtype).itemsize

    # Batch tile: exact block for tiny B (no padding / ragged batch blocks); for
    # B >= 16 guarantee >= 2 batch blocks so the "parallel" axis feeds both
    # TensorCores on v7x megacore.
    if B <= 16:
        tB = B
    else:
        tB = min(128, _round_up(pl.cdiv(B, 2), 8))

    # Time tile from a byte budget (~8 MiB/tile keeps the stream at the HBM-roofline
    # knee while 2x double-buffered tiles + bf16 weights + acc stay under ~20 MiB).
    tT = max(8, (tile_bytes // (tB * D_HID * itemsize)) // 8 * 8)
    tT = min(tT, _round_up(T, 8))

    grid = (pl.cdiv(B, tB), pl.cdiv(T, tT))

    t_true = T if valid_len is None else valid_len
    t_valid = jnp.asarray([t_true], jnp.int32)          # scalar prefetch (SMEM)
    need_mask = (valid_len is not None) or (T % tT != 0)

    def const(shape):
        return pl.BlockSpec(shape, lambda b, t, tv: (0,) * len(shape))

    out_padded = pl.pallas_call(
        functools.partial(_head_kernel, need_mask),
        out_shape=jax.ShapeDtypeStruct((B, N_CLS_PAD), jnp.float32),
        grid_spec=pltpu.PrefetchScalarGridSpec(
            num_scalar_prefetch=1,
            grid=grid,
            in_specs=[
                pl.BlockSpec((tB, tT, D_HID), lambda b, t, tv: (b, t, 0)),
                const((D_HID, D1)), const((1, D1)),
                const((D1, D2)), const((1, D2)),
                const((D2, N_CLS_PAD)), const((1, N_CLS_PAD)),
            ],
            out_specs=pl.BlockSpec((tB, N_CLS_PAD), lambda b, t, tv: (b, 0)),
            scratch_shapes=[pltpu.VMEM((tB, D_HID), jnp.float32)],
        ),
        compiler_params=pltpu.CompilerParams(
            dimension_semantics=("parallel", "arbitrary"),
            vmem_limit_bytes=_vmem_limit_bytes(),
        ),
    )(t_valid, hidden_states, w1f, c1, w2f, c2, w3p, b3p)

    return out_padded[:, :N_CLS]


def make_params(key):
    """Deterministic synthetic parameters matching the nn.Sequential classifier."""
    ks = jax.random.split(key, 14)

    def lin(kw, fan_in, fan_out):
        bound = 1.0 / jnp.sqrt(fan_in)
        return jax.random.uniform(kw, (fan_in, fan_out), jnp.float32, -bound, bound)

    w1 = lin(ks[0], D_HID, D1)
    b1 = jax.random.uniform(ks[1], (1, D1), jnp.float32, -0.05, 0.05)
    w2 = lin(ks[2], D1, D2)
    b2 = jax.random.uniform(ks[3], (1, D2), jnp.float32, -0.05, 0.05)
    w3 = lin(ks[4], D2, N_CLS)
    b3 = jax.random.uniform(ks[5], (1, N_CLS), jnp.float32, -0.05, 0.05)

    # BatchNorm1d eval-mode, folded to scale/shift: y = x*s + t
    def bn_fold(kg, kb, km, kv, dim):
        gamma = 1.0 + 0.1 * jax.random.normal(kg, (1, dim), jnp.float32)
        beta = 0.1 * jax.random.normal(kb, (1, dim), jnp.float32)
        mean = 0.1 * jax.random.normal(km, (1, dim), jnp.float32)
        var = jnp.abs(jax.random.normal(kv, (1, dim), jnp.float32)) + 0.5
        eps = 1e-5
        s = gamma / jnp.sqrt(var + eps)
        t = beta - mean * s
        return s, t

    s1, t1 = bn_fold(ks[6], ks[7], ks[8], ks[9], D1)
    s2, t2 = bn_fold(ks[10], ks[11], ks[12], ks[13], D2)

    return (w1, b1, s1, t1, w2, b2, s2, t2, w3, b3)


def reference_head(hidden_states, params):
    """Plain-JAX f32 reference of the same forward pass (eval mode)."""
    (w1, b1, s1, t1, w2, b2, s2, t2, w3, b3) = params
    x = jnp.mean(hidden_states, axis=1)
    x = jnp.maximum((x @ w1 + b1) * s1 + t1, 0.0)
    x = jnp.maximum((x @ w2 + b2) * s2 + t2, 0.0)
    return x @ w3 + b3


if __name__ == "__main__":
    key = jax.random.PRNGKey(0)
    k_h, k_h2, k_p = jax.random.split(key, 3)

    params = make_params(k_p)
    folded = prepare_head_params(params)

    # Small shape consistent with the module (stand-in for the frozen WavLM output).
    B, T = 2, 8
    hidden_states = jax.random.normal(k_h, (B, T, D_HID), jnp.float32)
    logits = jax.block_until_ready(spoof_detector_head(hidden_states, folded))
    ref = reference_head(hidden_states, params)
    assert logits.shape == (B, N_CLS)
    assert jnp.allclose(logits, ref, atol=2e-2, rtol=2e-2)

    # Longer sequence / odd batch: exercises the ragged-T in-kernel mask path.
    B2, T2 = 3, 100
    hidden_states2 = jax.random.normal(k_h2, (B2, T2, D_HID), jnp.float32)
    logits2 = jax.block_until_ready(spoof_detector_head(hidden_states2, folded))
    ref2 = reference_head(hidden_states2, params)
    assert logits2.shape == (B2, N_CLS)
    assert jnp.allclose(logits2, ref2, atol=2e-2, rtol=2e-2)

    # Length-bucketed serving path: clip padded to a bucket, true length via scalar
    # prefetch; result must match the unpadded run.
    T_BUCKET = 112
    hidden_bucketed = jnp.pad(hidden_states2, ((0, 0), (0, T_BUCKET - T2), (0, 0)))
    logits3 = jax.block_until_ready(
        spoof_detector_head(hidden_bucketed, folded, valid_len=T2))
    assert jnp.allclose(logits3, ref2, atol=2e-2, rtol=2e-2)

    print("KERNEL_OK")
</pallas_src>

<mosaic_0001>
module attributes {stable_mosaic.version = 11 : i64} {
  func.func @_head_kernel(%arg0: i32, %arg1: i32, %arg2: memref<1xi32, #tpu.memory_space<smem>>, %arg3: memref<2x8x768xf32, #tpu.memory_space<vmem>>, %arg4: memref<768x512xbf16, #tpu.memory_space<vmem>>, %arg5: memref<1x512xf32, #tpu.memory_space<vmem>>, %arg6: memref<512x128xbf16, #tpu.memory_space<vmem>>, %arg7: memref<1x128xf32, #tpu.memory_space<vmem>>, %arg8: memref<128x128xbf16, #tpu.memory_space<vmem>>, %arg9: memref<1x128xf32, #tpu.memory_space<vmem>>, %arg10: memref<2x128xf32, #tpu.memory_space<vmem>>, %arg11: memref<2x768xf32, #tpu.memory_space<vmem>>) attributes {dimension_semantics = [#tpu.dimension_semantics<parallel>, #tpu.dimension_semantics<arbitrary>], iteration_bounds = array<i64: 1, 1>, scalar_prefetch = 1 : i64, scratch_operands = 1 : i64, tpu.core_type = #tpu.core_type<tc>, window_params = [{transform_indices = @transform_0, window_bounds = array<i64: 2, 8, 768>}, {pipeline_mode = #tpu.pipeline_mode<synchronous>, transform_indices = @transform_1, window_bounds = array<i64: 768, 512>}, {pipeline_mode = #tpu.pipeline_mode<synchronous>, transform_indices = @transform_2, window_bounds = array<i64: 1, 512>}, {pipeline_mode = #tpu.pipeline_mode<synchronous>, transform_indices = @transform_3, window_bounds = array<i64: 512, 128>}, {pipeline_mode = #tpu.pipeline_mode<synchronous>, transform_indices = @transform_4, window_bounds = array<i64: 1, 128>}, {pipeline_mode = #tpu.pipeline_mode<synchronous>, transform_indices = @transform_5, window_bounds = array<i64: 128, 128>}, {pipeline_mode = #tpu.pipeline_mode<synchronous>, transform_indices = @transform_6, window_bounds = array<i64: 1, 128>}, {transform_indices = @transform_7, window_bounds = array<i64: 2, 128>}]} {
    %c0_i32 = arith.constant 0 : i32
    %0 = arith.cmpi eq, %arg1, %c0_i32 : i32
    %1 = arith.extui %0 : i1 to i32
    %c0_i32_0 = arith.constant 0 : i32
    %2 = arith.cmpi ne, %1, %c0_i32_0 : i32
    scf.if %2 {
      %cst_9 = arith.constant 0.000000e+00 : f32
      %11 = vector.broadcast %cst_9 : f32 to vector<2x768xf32>
      %c0_10 = arith.constant 0 : index
      %c0_11 = arith.constant 0 : index
      %12 = vector.load %arg11[%c0_10, %c0_11] : memref<2x768xf32, #tpu.memory_space<vmem>>, vector<2x768xf32>
      tpu.vector_store %arg11[%c0_10, %c0_11], %11 {strides = array<i32>} : memref<2x768xf32, #tpu.memory_space<vmem>>, vector<2x768xf32>,
    } else {
    }
    %c0 = arith.constant 0 : index
    %c0_1 = arith.constant 0 : index
    %c0_2 = arith.constant 0 : index
    %3 = vector.load %arg3[%c0, %c0_1, %c0_2] : memref<2x8x768xf32, #tpu.memory_space<vmem>>, vector<2x8x768xf32>
    %c0_3 = arith.constant 0 : index
    %c0_4 = arith.constant 0 : index
    %4 = vector.load %arg11[%c0_3, %c0_4] : memref<2x768xf32, #tpu.memory_space<vmem>>, vector<2x768xf32>
    %cst = arith.constant dense<0.000000e+00> : vector<2x768xf32>
    %5 = vector.multi_reduction <add>, %3, %cst [1] : vector<2x8x768xf32> to vector<2x768xf32>
    %6 = arith.addf %4, %5 : vector<2x768xf32>
    %c0_5 = arith.constant 0 : index
    %c0_6 = arith.constant 0 : index
    %7 = vector.load %arg11[%c0_5, %c0_6] : memref<2x768xf32, #tpu.memory_space<vmem>>, vector<2x768xf32>
    tpu.vector_store %arg11[%c0_5, %c0_6], %6 {strides = array<i32>} : memref<2x768xf32, #tpu.memory_space<vmem>>, vector<2x768xf32>,
    %c0_i32_7 = arith.constant 0 : i32
    %8 = arith.cmpi eq, %arg1, %c0_i32_7 : i32
    %9 = arith.extui %8 : i1 to i32
    %c0_i32_8 = arith.constant 0 : i32
    %10 = arith.cmpi ne, %9, %c0_i32_8 : i32
    scf.if %10 {
      %c0_9 = arith.constant 0 : index
      %11 = memref.load %arg2[%c0_9] : memref<1xi32, #tpu.memory_space<smem>>
      %12 = arith.sitofp %11 : i32 to f32
      %cst_10 = arith.constant 1.000000e+00 : f32
      %13 = arith.divf %cst_10, %12 : f32
      %c0_11 = arith.constant 0 : index
      %c0_12 = arith.constant 0 : index
      %14 = vector.load %arg11[%c0_11, %c0_12] : memref<2x768xf32, #tpu.memory_space<vmem>>, vector<2x768xf32>
      %15 = vector.broadcast %13 : f32 to vector<2x768xf32>
      %16 = arith.mulf %14, %15 : vector<2x768xf32>
      %17 = arith.truncf %16 : vector<2x768xf32> to vector<2x768xbf16>
      %c0_13 = arith.constant 0 : index
      %c0_14 = arith.constant 0 : index
      %18 = vector.load %arg4[%c0_13, %c0_14] : memref<768x512xbf16, #tpu.memory_space<vmem>>, vector<768x512xbf16>
      %cst_15 = arith.constant dense<0.000000e+00> : vector<2x512xf32>
      %19 = tpu.matmul %17, %18, %cst_15 {dimension_numbers = #tpu.dot_dimension_numbers<[1], [0], [0], [1], [0, 0, 1, 1], [], []>} : vector<2x768xbf16>, vector<768x512xbf16>, vector<2x512xf32> -> vector<2x512xf32>
      %c0_16 = arith.constant 0 : index
      %c0_17 = arith.constant 0 : index
      %20 = vector.load %arg5[%c0_16, %c0_17] : memref<1x512xf32, #tpu.memory_space<vmem>>, vector<1x512xf32>
      %21 = vector.broadcast %20 : vector<1x512xf32> to vector<2x512xf32>
      %22 = arith.addf %19, %21 : vector<2x512xf32>
      %cst_18 = arith.constant 0.000000e+00 : f32
      %23 = vector.broadcast %cst_18 : f32 to vector<2x512xf32>
      %24 = arith.maximumf %22, %23 : vector<2x512xf32>
      %25 = arith.truncf %24 : vector<2x512xf32> to vector<2x512xbf16>
      %c0_19 = arith.constant 0 : index
      %c0_20 = arith.constant 0 : index
      %26 = vector.load %arg6[%c0_19, %c0_20] : memref<512x128xbf16, #tpu.memory_space<vmem>>, vector<512x128xbf16>
      %cst_21 = arith.constant dense<0.000000e+00> : vector<2x128xf32>
      %27 = tpu.matmul %25, %26, %cst_21 {dimension_numbers = #tpu.dot_dimension_numbers<[1], [0], [0], [1], [0, 0, 1, 1], [], []>} : vector<2x512xbf16>, vector<512x128xbf16>, vector<2x128xf32> -> vector<2x128xf32>
      %c0_22 = arith.constant 0 : index
      %c0_23 = arith.constant 0 : index
      %28 = vector.load %arg7[%c0_22, %c0_23] : memref<1x128xf32, #tpu.memory_space<vmem>>, vector<1x128xf32>
      %29 = vector.broadcast %28 : vector<1x128xf32> to vector<2x128xf32>
      %30 = arith.addf %27, %29 : vector<2x128xf32>
      %cst_24 = arith.constant 0.000000e+00 : f32
      %31 = vector.broadcast %cst_24 : f32 to vector<2x128xf32>
      %32 = arith.maximumf %30, %31 : vector<2x128xf32>
      %33 = arith.truncf %32 : vector<2x128xf32> to vector<2x128xbf16>
      %c0_25 = arith.constant 0 : index
      %c0_26 = arith.constant 0 : index
      %34 = vector.load %arg8[%c0_25, %c0_26] : memref<128x128xbf16, #tpu.memory_space<vmem>>, vector<128x128xbf16>
      %cst_27 = arith.constant dense<0.000000e+00> : vector<2x128xf32>
      %35 = tpu.matmul %33, %34, %cst_27 {dimension_numbers = #tpu.dot_dimension_numbers<[1], [0], [0], [1], [0, 0, 1, 1], [], []>} : vector<2x128xbf16>, vector<128x128xbf16>, vector<2x128xf32> -> vector<2x128xf32>
      %c0_28 = arith.constant 0 : index
      %c0_29 = arith.constant 0 : index
      %36 = vector.load %arg9[%c0_28, %c0_29] : memref<1x128xf32, #tpu.memory_space<vmem>>, vector<1x128xf32>
      %37 = vector.broadcast %36 : vector<1x128xf32> to vector<2x128xf32>
      %38 = arith.addf %35, %37 : vector<2x128xf32>
      %c0_30 = arith.constant 0 : index
      %c0_31 = arith.constant 0 : index
      %39 = vector.load %arg10[%c0_30, %c0_31] : memref<2x128xf32, #tpu.memory_space<vmem>>, vector<2x128xf32>
      tpu.vector_store %arg10[%c0_30, %c0_31], %38 {strides = array<i32>} : memref<2x128xf32, #tpu.memory_space<vmem>>, vector<2x128xf32>,
    } else {
    }
    return
  }
  func.func @transform_0(%arg0: i32, %arg1: i32, %arg2: memref<1xi32, #tpu.memory_space<smem>>) -> (i32, i32, i32) {
    %c0_i32 = arith.constant 0 : i32
    %c0_i32_0 = arith.constant 0 : i32
    return %arg0, %arg1, %c0_i32 : i32, i32, i32
  }
  func.func @transform_1(%arg0: i32, %arg1: i32, %arg2: memref<1xi32, #tpu.memory_space<smem>>) -> (i32, i32) {
    %c0_i32 = arith.constant 0 : i32
    %c0_i32_0 = arith.constant 0 : i32
    %c0_i32_1 = arith.constant 0 : i32
    return %c0_i32, %c0_i32_0 : i32, i32
  }
  func.func @transform_2(%arg0: i32, %arg1: i32, %arg2: memref<1xi32, #tpu.memory_space<smem>>) -> (i32, i32) {
    %c0_i32 = arith.constant 0 : i32
    %c0_i32_0 = arith.constant 0 : i32
    %c0_i32_1 = arith.constant 0 : i32
    return %c0_i32, %c0_i32_0 : i32, i32
  }
  func.func @transform_3(%arg0: i32, %arg1: i32, %arg2: memref<1xi32, #tpu.memory_space<smem>>) -> (i32, i32) {
    %c0_i32 = arith.constant 0 : i32
    %c0_i32_0 = arith.constant 0 : i32
    %c0_i32_1 = arith.constant 0 : i32
    return %c0_i32, %c0_i32_0 : i32, i32
  }
  func.func @transform_4(%arg0: i32, %arg1: i32, %arg2: memref<1xi32, #tpu.memory_space<smem>>) -> (i32, i32) {
    %c0_i32 = arith.constant 0 : i32
    %c0_i32_0 = arith.constant 0 : i32
    %c0_i32_1 = arith.constant 0 : i32
    return %c0_i32, %c0_i32_0 : i32, i32
  }
  func.func @transform_5(%arg0: i32, %arg1: i32, %arg2: memref<1xi32, #tpu.memory_space<smem>>) -> (i32, i32) {
    %c0_i32 = arith.constant 0 : i32
    %c0_i32_0 = arith.constant 0 : i32
    %c0_i32_1 = arith.constant 0 : i32
    return %c0_i32, %c0_i32_0 : i32, i32
  }
  func.func @transform_6(%arg0: i32, %arg1: i32, %arg2: memref<1xi32, #tpu.memory_space<smem>>) -> (i32, i32) {
    %c0_i32 = arith.constant 0 : i32
    %c0_i32_0 = arith.constant 0 : i32
    %c0_i32_1 = arith.constant 0 : i32
    return %c0_i32, %c0_i32_0 : i32, i32
  }
  func.func @transform_7(%arg0: i32, %arg1: i32, %arg2: memref<1xi32, #tpu.memory_space<smem>>) -> (i32, i32) {
    %c0_i32 = arith.constant 0 : i32
    %c0_i32_0 = arith.constant 0 : i32
    return %arg0, %c0_i32 : i32, i32
  }
}

</mosaic_0001>

<llo_original>
// kernel: tpu_custom_call.1
$region0: #{tpu_custom_call.1}
  #allocation0 [shape = 'u32[]', space=smem, size = 0x4, offset = 0x4, fixed_abs, tag = 'smem constant byte address 0x4 - core index']
  #allocation1 [shape = 'u32[144,128]{1,0:T(1,128)}', space=vmem, size = 0x12000, scoped, tag = 'internal scratch']
  #allocation2 [shape = 'f32[2,768]{1,0:T(2,128)}', space=vmem, size = 0x1800, scoped, tag = 'scratch operand']
  #allocation3 [shape = 's32[1]{0}', space=sflag, size = 0x4, scoped, tag = 'scoped memory for tpu_custom_call.1']
  #allocation4 [shape = 's32[1]{0:T(128)S(6)}', space=smem, size = 0x200, scoped, tag = 'prefetched SMEM operand 0']
  %s0 = inlined_call_operand.<no memory space> [shape: s32[1], index: 0, kind: input, shape index: {}]
  %s1 = inlined_call_operand.hbm [shape: f32[2,8,768], index: 1, kind: input, shape index: {}]
  %s2 = inlined_call_operand.hbm [shape: bf16[768,512], index: 2, kind: input, shape index: {}]
  %s3 = inlined_call_operand.vmem [shape: f32[1,512], index: 3, kind: input, shape index: {}]
  %s4 = inlined_call_operand.hbm [shape: bf16[512,128], index: 4, kind: input, shape index: {}]
  %s5 = inlined_call_operand.vmem [shape: f32[1,128], index: 5, kind: input, shape index: {}]
  %s6 = inlined_call_operand.hbm [shape: bf16[128,128], index: 6, kind: input, shape index: {}]
  %s7 = inlined_call_operand.vmem [shape: f32[1,128], index: 7, kind: input, shape index: {}]
  %s8 = inlined_call_operand.hbm [shape: f32[2,128], index: 8, kind: output, shape index: {}]
  %s9 = sld [smem:[#allocation0]]
  $region62: #{tpu_custom_call.1} parent=0
    _
  %s11 = ssub.s32 1, %s9
  %s12 = scalar_select 0, %s11, %s9
  %13 = sst [smem:[#allocation4]] %s0
  $region1: #{tpu_custom_call.1} parent=0
    #allocation5 [shape = 'u8[49152]{0}', space=vmem, size = 0xc000, scoped, tag = 'input window, operand 1, single buffered']
    #allocation6 [shape = 's32[1]{0}', space=sflag, size = 0x4, scoped, tag = 'scoped memory for tpu_custom_call.1']
    #allocation7 [shape = 's32[1]{0}', space=sflag, size = 0x4, scoped, tag = 'scoped memory for tpu_custom_call.1']
    #allocation8 [shape = 'u8[786432]{0}', space=vmem, size = 0xc0000, scoped, tag = 'input window, operand 2, single buffered']
    #allocation9 [shape = 's32[1]{0}', space=sflag, size = 0x4, scoped, tag = 'scoped memory for tpu_custom_call.1']
    #allocation10 [shape = 'u8[131072]{0}', space=vmem, size = 0x20000, scoped, tag = 'input window, operand 4, single buffered']
    #allocation11 [shape = 'u8[32768]{0}', space=vmem, size = 0x8000, scoped, tag = 'input window, operand 6, single buffered']
    #allocation12 [shape = 's32[1]{0}', space=sflag, size = 0x4, scoped, tag = 'scoped memory for tpu_custom_call.1']
    #allocation13 [shape = 'u8[1024]{0}', space=vmem, size = 0x400, scoped, tag = 'output window, operand 0, single buffered']
    %14 = vsyncpa [#allocation6], 0
    %15 = vsyncpa [#allocation9], 0
    %16 = vsyncpa [#allocation12], 0
    %17 = vsyncpa [#allocation7], 0
    // Predicated region
    $region2: #{tpu_custom_call.1} parent=1 // pred_check
      _
    $region3: #{tpu_custom_call.1} parent=1 // pred_check_branch
      %19 = sbr.rel (0) target = $region5
    $region4: #{tpu_custom_call.1} parent=1 // pred_region
      %s21 = ssub.s32 1536, 1536
      %22 = vsyncadd [#allocation6], %s21
      %s23 = sshll.u32 [#allocation5], 4
      %s24 = int_to_ptr.vmem [resolvable:$true] %s23
      %29 = dma.hbm_to_vmem [thread:$0]  %s1, 1536, %s24, [#allocation6], 768, 768, 48
    $region5: #{tpu_custom_call.1} parent=1 // pred_fallthru
      _
    // Predicated region
    $region6: #{tpu_custom_call.1} parent=1 // pred_check
      _
    $region7: #{tpu_custom_call.1} parent=1 // pred_check_branch
      %31 = sbr.rel (0) target = $region9
    $region8: #{tpu_custom_call.1} parent=1 // pred_region
      %s33 = ssub.s32 24576, 24576
      %34 = vsyncadd [#allocation9], %s33
      %s35 = sshll.u32 [#allocation8], 4
      %s36 = int_to_ptr.vmem [resolvable:$true] %s35
      %41 = dma.hbm_to_vmem [thread:$0]  %s2, 24576, %s36, [#allocation9], 256, 256, 16
    $region9: #{tpu_custom_call.1} parent=1 // pred_fallthru
      _
    // Predicated region
    $region10: #{tpu_custom_call.1} parent=1 // pred_check
      _
    $region11: #{tpu_custom_call.1} parent=1 // pred_check_branch
      %43 = sbr.rel (0) target = $region13
    $region12: #{tpu_custom_call.1} parent=1 // pred_region
      _
    $region13: #{tpu_custom_call.1} parent=1 // pred_fallthru
      _
    // Predicated region
    $region14: #{tpu_custom_call.1} parent=1 // pred_check
      _
    $region15: #{tpu_custom_call.1} parent=1 // pred_check_branch
      %45 = sbr.rel (0) target = $region17
    $region16: #{tpu_custom_call.1} parent=1 // pred_region
      %s47 = ssub.s32 4096, 4096
      %48 = vsyncadd [#allocation9], %s47
      %s49 = sshll.u32 [#allocation10], 4
      %s50 = int_to_ptr.vmem [resolvable:$true] %s49
      %55 = dma.hbm_to_vmem [thread:$0]  %s4, 4096, %s50, [#allocation9], 64, 64, 4
    $region17: #{tpu_custom_call.1} parent=1 // pred_fallthru
      _
    // Predicated region
    $region18: #{tpu_custom_call.1} parent=1 // pred_check
      _
    $region19: #{tpu_custom_call.1} parent=1 // pred_check_branch
      %57 = sbr.rel (0) target = $region21
    $region20: #{tpu_custom_call.1} parent=1 // pred_region
      _
    $region21: #{tpu_custom_call.1} parent=1 // pred_fallthru
      _
    // Predicated region
    $region22: #{tpu_custom_call.1} parent=1 // pred_check
      _
    $region23: #{tpu_custom_call.1} parent=1 // pred_check_branch
      %59 = sbr.rel (0) target = $region25
    $region24: #{tpu_custom_call.1} parent=1 // pred_region
      %s61 = ssub.s32 1024, 1024
      %62 = vsyncadd [#allocation12], %s61
      %s63 = sshll.u32 [#allocation11], 4
      %s64 = int_to_ptr.vmem [resolvable:$true] %s63
      %69 = dma.hbm_to_vmem [thread:$0]  %s6, 1024, %s64, [#allocation12], 64, 64, 4
    $region25: #{tpu_custom_call.1} parent=1 // pred_fallthru
      _
    // Predicated region
    $region26: #{tpu_custom_call.1} parent=1 // pred_check
      _
    $region27: #{tpu_custom_call.1} parent=1 // pred_check_branch
      %71 = sbr.rel (0) target = $region29
    $region28: #{tpu_custom_call.1} parent=1 // pred_region
      _
    $region29: #{tpu_custom_call.1} parent=1 // pred_fallthru
      _
    // Predicated region
    $region30: #{tpu_custom_call.1} parent=1 // pred_check
      _
    $region31: #{tpu_custom_call.1} parent=1 // pred_check_branch
      %73 = sbr.rel (0) target = $region33
    $region32: #{tpu_custom_call.1} parent=1 // pred_region
      %74 = dma.done [#allocation6], 1536
    $region33: #{tpu_custom_call.1} parent=1 // pred_fallthru
      _
    // Predicated region
    $region34: #{tpu_custom_call.1} parent=1 // pred_check
      _
    $region35: #{tpu_custom_call.1} parent=1 // pred_check_branch
      %76 = sbr.rel (0) target = $region37
    $region36: #{tpu_custom_call.1} parent=1 // pred_region
      %77 = dma.done [#allocation9], 24576
    $region37: #{tpu_custom_call.1} parent=1 // pred_fallthru
      _
    // Predicated region
    $region38: #{tpu_custom_call.1} parent=1 // pred_check
      _
    $region39: #{tpu_custom_call.1} parent=1 // pred_check_branch
      %79 = sbr.rel (0) target = $region41
    $region40: #{tpu_custom_call.1} parent=1 // pred_region
      %80 = dma.done [#allocation9], 4096
    $region41: #{tpu_custom_call.1} parent=1 // pred_fallthru
      _
    // Predicated region
    $region42: #{tpu_custom_call.1} parent=1 // pred_check
      _
    $region43: #{tpu_custom_call.1} parent=1 // pred_check_branch
      %82 = sbr.rel (0) target = $region45
    $region44: #{tpu_custom_call.1} parent=1 // pred_region
      %83 = dma.done [#allocation12], 1024
    $region45: #{tpu_custom_call.1} parent=1 // pred_fallthru
      _
    %p85 = scmp.eq.s32.totalorder 0, 0
    // Predicated region
    $region46: #{tpu_custom_call.1} parent=1 // pred_check
      %p86 = pneg %p85
    $region47: #{tpu_custom_call.1} parent=1 // pred_check_branch
      %88 = sbr.rel (%p86) target = $region49
    $region48: #{tpu_custom_call.1} parent=1 // pred_region
      %89 = vst [vmem:[#allocation2] sm:$0xff] 0.0
      %90 = vst [vmem:[#allocation2 + $0x8] sm:$0xf] 0.0
    $region49: #{tpu_custom_call.1} parent=1 // pred_fallthru
      _
    %v91 = vld [vmem:[#allocation5] sm:$0xff]
    %v92 = vld [vmem:[#allocation5 + $0x8] sm:$0xff]
    %v93 = vld [vmem:[#allocation5 + $0x10] sm:$0xff]
    %v94 = vld [vmem:[#allocation5 + $0x18] sm:$0xff]
    %v95 = vld [vmem:[#allocation5 + $0x20] sm:$0xff]
    %v96 = vld [vmem:[#allocation5 + $0x28] sm:$0xff]
    %v97 = vld [vmem:[#allocation5 + $0x30] sm:$0xff]
    %v98 = vld [vmem:[#allocation5 + $0x38] sm:$0xff]
    %v99 = vld [vmem:[#allocation5 + $0x40] sm:$0xff]
    %v100 = vld [vmem:[#allocation5 + $0x48] sm:$0xff]
    %v101 = vld [vmem:[#allocation5 + $0x50] sm:$0xff]
    %v102 = vld [vmem:[#allocation5 + $0x58] sm:$0xff]
    %v103 = vld [vmem:[#allocation2] sm:$0xff]
    %v104 = vld [vmem:[#allocation2 + $0x8] sm:$0xf]
    %v105 = vrot.slane %v91, 4
    %v106 = vadd.f32 %v91, %v105
    %v107 = vrot.slane %v106, 2
    %v108 = vadd.f32 %v106, %v107
    %v109 = vrot.slane %v108, 1
    %v110 = vadd.f32 %v108, %v109
    %v111 = vrot.slane %v92, 4
    %v112 = vadd.f32 %v92, %v111
    %v113 = vrot.slane %v112, 2
    %v114 = vadd.f32 %v112, %v113
    %v115 = vrot.slane %v114, 1
    %v116 = vadd.f32 %v114, %v115
    %v117 = vrot.slane %v93, 4
    %v118 = vadd.f32 %v93, %v117
    %v119 = vrot.slane %v118, 2
    %v120 = vadd.f32 %v118, %v119
    %v121 = vrot.slane %v120, 1
    %v122 = vadd.f32 %v120, %v121
    %v123 = vrot.slane %v94, 4
    %v124 = vadd.f32 %v94, %v123
    %v125 = vrot.slane %v124, 2
    %v126 = vadd.f32 %v124, %v125
    %v127 = vrot.slane %v126, 1
    %v128 = vadd.f32 %v126, %v127
    %v129 = vrot.slane %v95, 4
    %v130 = vadd.f32 %v95, %v129
    %v131 = vrot.slane %v130, 2
    %v132 = vadd.f32 %v130, %v131
    %v133 = vrot.slane %v132, 1
    %v134 = vadd.f32 %v132, %v133
    %v135 = vrot.slane %v96, 4
    %v136 = vadd.f32 %v96, %v135
    %v137 = vrot.slane %v136, 2
    %v138 = vadd.f32 %v136, %v137
    %v139 = vrot.slane %v138, 1
    %v140 = vadd.f32 %v138, %v139
    %v141 = vrot.slane %v97, 4
    %v142 = vadd.f32 %v97, %v141
    %v143 = vrot.slane %v142, 2
    %v144 = vadd.f32 %v142, %v143
    %v145 = vrot.slane %v144, 1
    %v146 = vadd.f32 %v144, %v145
    %v147 = vrot.slane %v98, 4
    %v148 = vadd.f32 %v98, %v147
    %v149 = vrot.slane %v148, 2
    %v150 = vadd.f32 %v148, %v149
    %v151 = vrot.slane %v150, 1
    %v152 = vadd.f32 %v150, %v151
    %v153 = vrot.slane %v99, 4
    %v154 = vadd.f32 %v99, %v153
    %v155 = vrot.slane %v154, 2
    %v156 = vadd.f32 %v154, %v155
    %v157 = vrot.slane %v156, 1
    %v158 = vadd.f32 %v156, %v157
    %v159 = vrot.slane %v100, 4
    %v160 = vadd.f32 %v100, %v159
    %v161 = vrot.slane %v160, 2
    %v162 = vadd.f32 %v160, %v161
    %v163 = vrot.slane %v162, 1
    %v164 = vadd.f32 %v162, %v163
    %v165 = vrot.slane %v101, 4
    %v166 = vadd.f32 %v101, %v165
    %v167 = vrot.slane %v166, 2
    %v168 = vadd.f32 %v166, %v167
    %v169 = vrot.slane %v168, 1
    %v170 = vadd.f32 %v168, %v169
    %v171 = vrot.slane %v102, 4
    %v172 = vadd.f32 %v102, %v171
    %v173 = vrot.slane %v172, 2
    %v174 = vadd.f32 %v172, %v173
    %v175 = vrot.slane %v174, 1
    %v176 = vadd.f32 %v174, %v175
    %v189 = vcombine.low %v110, %v116
    %v190 = vcombine.low %v122, %v128
    %v192 = vunpack.c.l.s4 1983009808
    %v193 = vunpack.c.0.s8 %v192
    %v194 = vlaneseq
    %v195 = vshrl.u32 %v194, 7
    %v196 = vsub.s32 %v193, %v195
    %v197 = vrot.slane %v189, %v196
    %v199 = vunpack.c.l.s4 1983009808
    %v200 = vunpack.c.0.s8 %v199
    %v201 = vlaneseq
    %v202 = vshrl.u32 %v201, 7
    %v203 = vsub.s32 %v200, %v202
    %v204 = vrot.slane %v190, %v203
    %v205 = vcombine.low %v197, %v204
    %v206 = vcombine.low %v134, %v140
    %v208 = vunpack.c.l.s4 1983009808
    %v209 = vunpack.c.0.s8 %v208
    %v210 = vlaneseq
    %v211 = vshrl.u32 %v210, 7
    %v212 = vsub.s32 %v209, %v211
    %v213 = vrot.slane %v206, %v212
    %v214 = vcombine.low %v146, %v152
    %v215 = vcombine.low %v158, %v164
    %v217 = vunpack.c.l.s4 1983009808
    %v218 = vunpack.c.0.s8 %v217
    %v219 = vlaneseq
    %v220 = vshrl.u32 %v219, 7
    %v221 = vsub.s32 %v218, %v220
    %v222 = vrot.slane %v214, %v221
    %v224 = vunpack.c.l.s4 1983009808
    %v225 = vunpack.c.0.s8 %v224
    %v226 = vlaneseq
    %v227 = vshrl.u32 %v226, 7
    %v228 = vsub.s32 %v225, %v227
    %v229 = vrot.slane %v215, %v228
    %v230 = vcombine.low %v222, %v229
    %v231 = vcombine.low %v170, %v176
    %v233 = vunpack.c.l.s4 1983009808
    %v234 = vunpack.c.0.s8 %v233
    %v235 = vlaneseq
    %v236 = vshrl.u32 %v235, 7
    %v237 = vsub.s32 %v234, %v236
    %v238 = vrot.slane %v231, %v237
    %vm239 = vcmask 1044484
    %v240 = vsel %vm239, %v205, %v205
    %vm241 = vcmask 1046534
    %v242 = vsel %vm241, %v205, %v240
    %v243 = vrot.slane %v230, 7
    %vm244 = vcmask 1041409
    %v245 = vsel %vm244, %v243, %v242
    %vm246 = vcmask 1043459
    %v247 = vsel %vm246, %v243, %v245
    %vm248 = vcmask 1045509
    %v249 = vsel %vm248, %v243, %v247
    %vm250 = vcmask 1047559
    %v251 = vsel %vm250, %v243, %v249
    %v252 = vsel %vm239, %v213, %v213
    %v253 = vsel %vm241, %v213, %v252
    %v254 = vrot.slane %v238, 7
    %v255 = vsel %vm244, %v254, %v253
    %v256 = vsel %vm246, %v254, %v255
    %v257 = vsel %vm248, %v254, %v256
    %v258 = vsel %vm250, %v254, %v257
    %v261 = vadd.f32 %v103, %v251
    %v262 = vadd.f32 %v104, %v258
    %263 = vst [vmem:[#allocation2] sm:$0xff] %v261
    %264 = vst [vmem:[#allocation2 + $0x8] sm:$0xf] %v262
    // Predicated region
    $region50: #{tpu_custom_call.1} parent=1 // pred_check
      %p265 = pneg %p85
    $region51: #{tpu_custom_call.1} parent=1 // pred_check_branch
      %267 = sbr.rel (%p265) target = $region53
    $region52: #{tpu_custom_call.1} parent=1 // pred_region
      %s268 = sld [smem:[#allocation4]]
      %s269 = scvt.s32.f32 %s268
      %v270 = vstv %s269
      %v271 = vrcp.pop %v270
      %s272 = vtos %v271
      %v273 = vld [vmem:[#allocation2] sm:$0xff]
      %v274 = vld [vmem:[#allocation2 + $0x8] sm:$0xf]
      %v275 = vstv %s272
      %v276 = vmul.f32 %v273, %v275
      %v277 = vmul.f32 %v274, %v275
      %v280 = vcombine.high %v276, %v276
      %v282 = vunpack.c.l.s4 1983009808
      %v283 = vunpack.c.0.s8 %v282
      %v284 = vlaneseq
      %v285 = vshrl.u32 %v284, 7
      %v286 = vsub.s32 %v283, %v285
      %v287 = vrot.slane %v276, %v286
      %v289 = vunpack.c.l.s4 1983009808
      %v290 = vunpack.c.0.s8 %v289
      %v291 = vlaneseq
      %v292 = vshrl.u32 %v291, 7
      %v293 = vsub.s32 %v290, %v292
      %v294 = vrot.slane %v280, %v293
      %v295 = vcombine.high %v287, %v287
      %v296 = vcombine.high %v294, %v294
      %v298 = vunpack.c.l.s4 1983009808
      %v299 = vunpack.c.0.s8 %v298
      %v300 = vlaneseq
      %v301 = vshrl.u32 %v300, 7
      %v302 = vsub.s32 %v299, %v301
      %v303 = vrot.slane %v277, %v302
      %v304 = vcombine.high %v303, %v303
      %v311 = vpack.c.bf16 %v287, %v287
      %v312 = vpack.c.bf16 %v295, %v295
      %v313 = vpack.c.bf16 %v294, %v294
      %v314 = vpack.c.bf16 %v296, %v296
      %v315 = vpack.c.bf16 %v303, %v303
      %v316 = vpack.c.bf16 %v304, %v304
      %v317 = vld [vmem:[#allocation8] sm:$0xff]
      %v318 = vld [vmem:[#allocation8 + $0x8] sm:$0xff]
      %v319 = vld [vmem:[#allocation8 + $0x10] sm:$0xff]
      %v320 = vld [vmem:[#allocation8 + $0x18] sm:$0xff]
      %v321 = vld [vmem:[#allocation8 + $0x20] sm:$0xff]
      %v322 = vld [vmem:[#allocation8 + $0x28] sm:$0xff]
      %v323 = vld [vmem:[#allocation8 + $0x30] sm:$0xff]
      %v324 = vld [vmem:[#allocation8 + $0x38] sm:$0xff]
      %v325 = vld [vmem:[#allocation8 + $0x40] sm:$0xff]
      %v326 = vld [vmem:[#allocation8 + $0x48] sm:$0xff]
      %v327 = vld [vmem:[#allocation8 + $0x50] sm:$0xff]
      %v328 = vld [vmem:[#allocation8 + $0x58] sm:$0xff]
      %v329 = vld [vmem:[#allocation8 + $0x60] sm:$0xff]
      %v330 = vld [vmem:[#allocation8 + $0x68] sm:$0xff]
      %v331 = vld [vmem:[#allocation8 + $0x70] sm:$0xff]
      %v332 = vld [vmem:[#allocation8 + $0x78] sm:$0xff]
      %v333 = vld [vmem:[#allocation8 + $0x80] sm:$0xff]
      %v334 = vld [vmem:[#allocation8 + $0x88] sm:$0xff]
      %v335 = vld [vmem:[#allocation8 + $0x90] sm:$0xff]
      %v336 = vld [vmem:[#allocation8 + $0x98] sm:$0xff]
      %v337 = vld [vmem:[#allocation8 + $0xa0] sm:$0xff]
      %v338 = vld [vmem:[#allocation8 + $0xa8] sm:$0xff]
      %v339 = vld [vmem:[#allocation8 + $0xb0] sm:$0xff]
      %v340 = vld [vmem:[#allocation8 + $0xb8] sm:$0xff]
      %v341 = vld [vmem:[#allocation8 + $0xc0] sm:$0xff]
      %v342 = vld [vmem:[#allocation8 + $0xc8] sm:$0xff]
      %v343 = vld [vmem:[#allocation8 + $0xd0] sm:$0xff]
      %v344 = vld [vmem:[#allocation8 + $0xd8] sm:$0xff]
      %v345 = vld [vmem:[#allocation8 + $0xe0] sm:$0xff]
      %v346 = vld [vmem:[#allocation8 + $0xe8] sm:$0xff]
      %v347 = vld [vmem:[#allocation8 + $0xf0] sm:$0xff]
      %v348 = vld [vmem:[#allocation8 + $0xf8] sm:$0xff]
      %v349 = vld [vmem:[#allocation8 + $0x100] sm:$0xff]
      %v350 = vld [vmem:[#allocation8 + $0x108] sm:$0xff]
      %v351 = vld [vmem:[#allocation8 + $0x110] sm:$0xff]
      %v352 = vld [vmem:[#allocation8 + $0x118] sm:$0xff]
      %v353 = vld [vmem:[#allocation8 + $0x120] sm:$0xff]
      %v354 = vld [vmem:[#allocation8 + $0x128] sm:$0xff]
      %v355 = vld [vmem:[#allocation8 + $0x130] sm:$0xff]
      %v356 = vld [vmem:[#allocation8 + $0x138] sm:$0xff]
      %v357 = vld [vmem:[#allocation8 + $0x140] sm:$0xff]
      %v358 = vld [vmem:[#allocation8 + $0x148] sm:$0xff]
      %v359 = vld [vmem:[#allocation8 + $0x150] sm:$0xff]
      %v360 = vld [vmem:[#allocation8 + $0x158] sm:$0xff]
      %v361 = vld [vmem:[#allocation8 + $0x160] sm:$0xff]
      %v362 = vld [vmem:[#allocation8 + $0x168] sm:$0xff]
      %v363 = vld [vmem:[#allocation8 + $0x170] sm:$0xff]
      %v364 = vld [vmem:[#allocation8 + $0x178] sm:$0xff]
      %v365 = vld [vmem:[#allocation8 + $0x180] sm:$0xff]
      %v366 = vld [vmem:[#allocation8 + $0x188] sm:$0xff]
      %v367 = vld [vmem:[#allocation8 + $0x190] sm:$0xff]
      %v368 = vld [vmem:[#allocation8 + $0x198] sm:$0xff]
      %v369 = vld [vmem:[#allocation8 + $0x1a0] sm:$0xff]
      %v370 = vld [vmem:[#allocation8 + $0x1a8] sm:$0xff]
      %v371 = vld [vmem:[#allocation8 + $0x1b0] sm:$0xff]
      %v372 = vld [vmem:[#allocation8 + $0x1b8] sm:$0xff]
      %v373 = vld [vmem:[#allocation8 + $0x1c0] sm:$0xff]
      %v374 = vld [vmem:[#allocation8 + $0x1c8] sm:$0xff]
      %v375 = vld [vmem:[#allocation8 + $0x1d0] sm:$0xff]
      %v376 = vld [vmem:[#allocation8 + $0x1d8] sm:$0xff]
      %v377 = vld [vmem:[#allocation8 + $0x1e0] sm:$0xff]
      %v378 = vld [vmem:[#allocation8 + $0x1e8] sm:$0xff]
      %v379 = vld [vmem:[#allocation8 + $0x1f0] sm:$0xff]
      %v380 = vld [vmem:[#allocation8 + $0x1f8] sm:$0xff]
      %v381 = vld [vmem:[#allocation8 + $0x200] sm:$0xff]
      %v382 = vld [vmem:[#allocation8 + $0x208] sm:$0xff]
      %v383 = vld [vmem:[#allocation8 + $0x210] sm:$0xff]
      %v384 = vld [vmem:[#allocation8 + $0x218] sm:$0xff]
      %v385 = vld [vmem:[#allocation8 + $0x220] sm:$0xff]
      %v386 = vld [vmem:[#allocation8 + $0x228] sm:$0xff]
      %v387 = vld [vmem:[#allocation8 + $0x230] sm:$0xff]
      %v388 = vld [vmem:[#allocation8 + $0x238] sm:$0xff]
      %v389 = vld [vmem:[#allocation8 + $0x240] sm:$0xff]
      %v390 = vld [vmem:[#allocation8 + $0x248] sm:$0xff]
      %v391 = vld [vmem:[#allocation8 + $0x250] sm:$0xff]
      %v392 = vld [vmem:[#allocation8 + $0x258] sm:$0xff]
      %v393 = vld [vmem:[#allocation8 + $0x260] sm:$0xff]
      %v394 = vld [vmem:[#allocation8 + $0x268] sm:$0xff]
      %v395 = vld [vmem:[#allocation8 + $0x270] sm:$0xff]
      %v396 = vld [vmem:[#allocation8 + $0x278] sm:$0xff]
      %v397 = vld [vmem:[#allocation8 + $0x280] sm:$0xff]
      %v398 = vld [vmem:[#allocation8 + $0x288] sm:$0xff]
      %v399 = vld [vmem:[#allocation8 + $0x290] sm:$0xff]
      %v400 = vld [vmem:[#allocation8 + $0x298] sm:$0xff]
      %v401 = vld [vmem:[#allocation8 + $0x2a0] sm:$0xff]
      %v402 = vld [vmem:[#allocation8 + $0x2a8] sm:$0xff]
      %v403 = vld [vmem:[#allocation8 + $0x2b0] sm:$0xff]
      %v404 = vld [vmem:[#allocation8 + $0x2b8] sm:$0xff]
      %v405 = vld [vmem:[#allocation8 + $0x2c0] sm:$0xff]
      %v406 = vld [vmem:[#allocation8 + $0x2c8] sm:$0xff]
      %v407 = vld [vmem:[#allocation8 + $0x2d0] sm:$0xff]
      %v408 = vld [vmem:[#allocation8 + $0x2d8] sm:$0xff]
      %v409 = vld [vmem:[#allocation8 + $0x2e0] sm:$0xff]
      %v410 = vld [vmem:[#allocation8 + $0x2e8] sm:$0xff]
      %v411 = vld [vmem:[#allocation8 + $0x2f0] sm:$0xff]
      %v412 = vld [vmem:[#allocation8 + $0x2f8] sm:$0xff]
      %v413 = vld [vmem:[#allocation8 + $0x300] sm:$0xff]
      %v414 = vld [vmem:[#allocation8 + $0x308] sm:$0xff]
      %v415 = vld [vmem:[#allocation8 + $0x310] sm:$0xff]
      %v416 = vld [vmem:[#allocation8 + $0x318] sm:$0xff]
      %v417 = vld [vmem:[#allocation8 + $0x320] sm:$0xff]
      %v418 = vld [vmem:[#allocation8 + $0x328] sm:$0xff]
      %v419 = vld [vmem:[#allocation8 + $0x330] sm:$0xff]
      %v420 = vld [vmem:[#allocation8 + $0x338] sm:$0xff]
      %v421 = vld [vmem:[#allocation8 + $0x340] sm:$0xff]
      %v422 = vld [vmem:[#allocation8 + $0x348] sm:$0xff]
      %v423 = vld [vmem:[#allocation8 + $0x350] sm:$0xff]
      %v424 = vld [vmem:[#allocation8 + $0x358] sm:$0xff]
      %v425 = vld [vmem:[#allocation8 + $0x360] sm:$0xff]
      %v426 = vld [vmem:[#allocation8 + $0x368] sm:$0xff]
      %v427 = vld [vmem:[#allocation8 + $0x370] sm:$0xff]
      %v428 = vld [vmem:[#allocation8 + $0x378] sm:$0xff]
      %v429 = vld [vmem:[#allocation8 + $0x380] sm:$0xff]
      %v430 = vld [vmem:[#allocation8 + $0x388] sm:$0xff]
      %v431 = vld [vmem:[#allocation8 + $0x390] sm:$0xff]
      %v432 = vld [vmem:[#allocation8 + $0x398] sm:$0xff]
      %v433 = vld [vmem:[#allocation8 + $0x3a0] sm:$0xff]
      %v434 = vld [vmem:[#allocation8 + $0x3a8] sm:$0xff]
      %v435 = vld [vmem:[#allocation8 + $0x3b0] sm:$0xff]
      %v436 = vld [vmem:[#allocation8 + $0x3b8] sm:$0xff]
      %v437 = vld [vmem:[#allocation8 + $0x3c0] sm:$0xff]
      %v438 = vld [vmem:[#allocation8 + $0x3c8] sm:$0xff]
      %v439 = vld [vmem:[#allocation8 + $0x3d0] sm:$0xff]
      %v440 = vld [vmem:[#allocation8 + $0x3d8] sm:$0xff]
      %v441 = vld [vmem:[#allocation8 + $0x3e0] sm:$0xff]
      %v442 = vld [vmem:[#allocation8 + $0x3e8] sm:$0xff]
      %v443 = vld [vmem:[#allocation8 + $0x3f0] sm:$0xff]
      %v444 = vld [vmem:[#allocation8 + $0x3f8] sm:$0xff]
      %v445 = vld [vmem:[#allocation8 + $0x400] sm:$0xff]
      %v446 = vld [vmem:[#allocation8 + $0x408] sm:$0xff]
      %v447 = vld [vmem:[#allocation8 + $0x410] sm:$0xff]
      %v448 = vld [vmem:[#allocation8 + $0x418] sm:$0xff]
      %v449 = vld [vmem:[#allocation8 + $0x420] sm:$0xff]
      %v450 = vld [vmem:[#allocation8 + $0x428] sm:$0xff]
      %v451 = vld [vmem:[#allocation8 + $0x430] sm:$0xff]
      %v452 = vld [vmem:[#allocation8 + $0x438] sm:$0xff]
      %v453 = vld [vmem:[#allocation8 + $0x440] sm:$0xff]
      %v454 = vld [vmem:[#allocation8 + $0x448] sm:$0xff]
      %v455 = vld [vmem:[#allocation8 + $0x450] sm:$0xff]
      %v456 = vld [vmem:[#allocation8 + $0x458] sm:$0xff]
      %v457 = vld [vmem:[#allocation8 + $0x460] sm:$0xff]
      %v458 = vld [vmem:[#allocation8 + $0x468] sm:$0xff]
      %v459 = vld [vmem:[#allocation8 + $0x470] sm:$0xff]
      %v460 = vld [vmem:[#allocation8 + $0x478] sm:$0xff]
      %v461 = vld [vmem:[#allocation8 + $0x480] sm:$0xff]
      %v462 = vld [vmem:[#allocation8 + $0x488] sm:$0xff]
      %v463 = vld [vmem:[#allocation8 + $0x490] sm:$0xff]
      %v464 = vld [vmem:[#allocation8 + $0x498] sm:$0xff]
      %v465 = vld [vmem:[#allocation8 + $0x4a0] sm:$0xff]
      %v466 = vld [vmem:[#allocation8 + $0x4a8] sm:$0xff]
      %v467 = vld [vmem:[#allocation8 + $0x4b0] sm:$0xff]
      %v468 = vld [vmem:[#allocation8 + $0x4b8] sm:$0xff]
      %v469 = vld [vmem:[#allocation8 + $0x4c0] sm:$0xff]
      %v470 = vld [vmem:[#allocation8 + $0x4c8] sm:$0xff]
      %v471 = vld [vmem:[#allocation8 + $0x4d0] sm:$0xff]
      %v472 = vld [vmem:[#allocation8 + $0x4d8] sm:$0xff]
      %v473 = vld [vmem:[#allocation8 + $0x4e0] sm:$0xff]
      %v474 = vld [vmem:[#allocation8 + $0x4e8] sm:$0xff]
      %v475 = vld [vmem:[#allocation8 + $0x4f0] sm:$0xff]
      %v476 = vld [vmem:[#allocation8 + $0x4f8] sm:$0xff]
      %v477 = vld [vmem:[#allocation8 + $0x500] sm:$0xff]
      %v478 = vld [vmem:[#allocation8 + $0x508] sm:$0xff]
      %v479 = vld [vmem:[#allocation8 + $0x510] sm:$0xff]
      %v480 = vld [vmem:[#allocation8 + $0x518] sm:$0xff]
      %v481 = vld [vmem:[#allocation8 + $0x520] sm:$0xff]
      %v482 = vld [vmem:[#allocation8 + $0x528] sm:$0xff]
      %v483 = vld [vmem:[#allocation8 + $0x530] sm:$0xff]
      %v484 = vld [vmem:[#allocation8 + $0x538] sm:$0xff]
      %v485 = vld [vmem:[#allocation8 + $0x540] sm:$0xff]
      %v486 = vld [vmem:[#allocation8 + $0x548] sm:$0xff]
      %v487 = vld [vmem:[#allocation8 + $0x550] sm:$0xff]
      %v488 = vld [vmem:[#allocation8 + $0x558] sm:$0xff]
      %v489 = vld [vmem:[#allocation8 + $0x560] sm:$0xff]
      %v490 = vld [vmem:[#allocation8 + $0x568] sm:$0xff]
      %v491 = vld [vmem:[#allocation8 + $0x570] sm:$0xff]
      %v492 = vld [vmem:[#allocation8 + $0x578] sm:$0xff]
      %v493 = vld [vmem:[#allocation8 + $0x580] sm:$0xff]
      %v494 = vld [vmem:[#allocation8 + $0x588] sm:$0xff]
      %v495 = vld [vmem:[#allocation8 + $0x590] sm:$0xff]
      %v496 = vld [vmem:[#allocation8 + $0x598] sm:$0xff]
      %v497 = vld [vmem:[#allocation8 + $0x5a0] sm:$0xff]
      %v498 = vld [vmem:[#allocation8 + $0x5a8] sm:$0xff]
      %v499 = vld [vmem:[#allocation8 + $0x5b0] sm:$0xff]
      %v500 = vld [vmem:[#allocation8 + $0x5b8] sm:$0xff]
      %v501 = vld [vmem:[#allocation8 + $0x5c0] sm:$0xff]
      %v502 = vld [vmem:[#allocation8 + $0x5c8] sm:$0xff]
      %v503 = vld [vmem:[#allocation8 + $0x5d0] sm:$0xff]
      %v504 = vld [vmem:[#allocation8 + $0x5d8] sm:$0xff]
      %v505 = vld [vmem:[#allocation8 + $0x5e0] sm:$0xff]
      %v506 = vld [vmem:[#allocation8 + $0x5e8] sm:$0xff]
      %v507 = vld [vmem:[#allocation8 + $0x5f0] sm:$0xff]
      %v508 = vld [vmem:[#allocation8 + $0x5f8] sm:$0xff]
      %v509 = vld [vmem:[%s3] sm:$0xf]
      %v511 = vlaneseq
      %v512 = vshrl.u32 %v511, 7
      %v513 = vsub.s32 0, %v512
      %v514 = vrot.slane %v509, %v513
      %v515 = vlaneseq
      %v516 = vshrl.u32 %v515, 7
      %v517 = vsub.s32 1, %v516
      %v518 = vrot.slane %v509, %v517
      %v519 = vlaneseq
      %v520 = vshrl.u32 %v519, 7
      %v521 = vsub.s32 2, %v520
      %v522 = vrot.slane %v509, %v521
      %v523 = vlaneseq
      %v524 = vshrl.u32 %v523, 7
      %v525 = vsub.s32 3, %v524
      %v526 = vrot.slane %v509, %v525
      %v723 = vunpack.c.l.b16 %v317
      %v724 = vunpack.c.h.b16 %v317
      %v725 = vunpack.c.l.b16 %v318
      %v726 = vunpack.c.h.b16 %v318
      %v727 = vunpack.c.l.b16 %v319
      %v728 = vunpack.c.h.b16 %v319
      %v729 = vunpack.c.l.b16 %v320
      %v730 = vunpack.c.h.b16 %v320
      %v731 = vunpack.c.l.b16 %v321
      %v732 = vunpack.c.h.b16 %v321
      %v733 = vunpack.c.l.b16 %v322
      %v734 = vunpack.c.h.b16 %v322
      %v735 = vunpack.c.l.b16 %v323
      %v736 = vunpack.c.h.b16 %v323
      %v737 = vunpack.c.l.b16 %v324
      %v738 = vunpack.c.h.b16 %v324
      %v739 = vunpack.c.l.b16 %v325
      %v740 = vunpack.c.h.b16 %v325
      %v741 = vunpack.c.l.b16 %v326
      %v742 = vunpack.c.h.b16 %v326
      %v743 = vunpack.c.l.b16 %v327
      %v744 = vunpack.c.h.b16 %v327
      %v745 = vunpack.c.l.b16 %v328
      %v746 = vunpack.c.h.b16 %v328
      %v747 = vunpack.c.l.b16 %v329
      %v748 = vunpack.c.h.b16 %v329
      %v749 = vunpack.c.l.b16 %v330
      %v750 = vunpack.c.h.b16 %v330
      %v751 = vunpack.c.l.b16 %v331
      %v752 = vunpack.c.h.b16 %v331
      %v753 = vunpack.c.l.b16 %v332
      %v754 = vunpack.c.h.b16 %v332
      %v755 = vunpack.c.l.b16 %v333
      %v756 = vunpack.c.h.b16 %v333
      %v757 = vunpack.c.l.b16 %v334
      %v758 = vunpack.c.h.b16 %v334
      %v759 = vunpack.c.l.b16 %v335
      %v760 = vunpack.c.h.b16 %v335
      %v761 = vunpack.c.l.b16 %v336
      %v762 = vunpack.c.h.b16 %v336
      %v763 = vunpack.c.l.b16 %v337
      %v764 = vunpack.c.h.b16 %v337
      %v765 = vunpack.c.l.b16 %v338
      %v766 = vunpack.c.h.b16 %v338
      %v767 = vunpack.c.l.b16 %v339
      %v768 = vunpack.c.h.b16 %v339
      %v769 = vunpack.c.l.b16 %v340
      %v770 = vunpack.c.h.b16 %v340
      %v771 = vunpack.c.l.b16 %v341
      %v772 = vunpack.c.h.b16 %v341
      %v773 = vunpack.c.l.b16 %v342
      %v774 = vunpack.c.h.b16 %v342
      %v775 = vunpack.c.l.b16 %v343
      %v776 = vunpack.c.h.b16 %v343
      %v777 = vunpack.c.l.b16 %v344
      %v778 = vunpack.c.h.b16 %v344
      %v779 = vunpack.c.l.b16 %v345
      %v780 = vunpack.c.h.b16 %v345
      %v781 = vunpack.c.l.b16 %v346
      %v782 = vunpack.c.h.b16 %v346
      %v783 = vunpack.c.l.b16 %v347
      %v784 = vunpack.c.h.b16 %v347
      %v785 = vunpack.c.l.b16 %v348
      %v786 = vunpack.c.h.b16 %v348
      %v787 = vunpack.c.l.b16 %v349
      %v788 = vunpack.c.h.b16 %v349
      %v789 = vunpack.c.l.b16 %v350
      %v790 = vunpack.c.h.b16 %v350
      %v791 = vunpack.c.l.b16 %v351
      %v792 = vunpack.c.h.b16 %v351
      %v793 = vunpack.c.l.b16 %v352
      %v794 = vunpack.c.h.b16 %v352
      %v795 = vunpack.c.l.b16 %v353
      %v796 = vunpack.c.h.b16 %v353
      %v797 = vunpack.c.l.b16 %v354
      %v798 = vunpack.c.h.b16 %v354
      %v799 = vunpack.c.l.b16 %v355
      %v800 = vunpack.c.h.b16 %v355
      %v801 = vunpack.c.l.b16 %v356
      %v802 = vunpack.c.h.b16 %v356
      %v803 = vunpack.c.l.b16 %v357
      %v804 = vunpack.c.h.b16 %v357
      %v805 = vunpack.c.l.b16 %v358
      %v806 = vunpack.c.h.b16 %v358
      %v807 = vunpack.c.l.b16 %v359
      %v808 = vunpack.c.h.b16 %v359
      %v809 = vunpack.c.l.b16 %v360
      %v810 = vunpack.c.h.b16 %v360
      %v811 = vunpack.c.l.b16 %v361
      %v812 = vunpack.c.h.b16 %v361
      %v813 = vunpack.c.l.b16 %v362
      %v814 = vunpack.c.h.b16 %v362
      %v815 = vunpack.c.l.b16 %v363
      %v816 = vunpack.c.h.b16 %v363
      %v817 = vunpack.c.l.b16 %v364
      %v818 = vunpack.c.h.b16 %v364
      %v819 = vunpack.c.l.b16 %v365
      %v820 = vunpack.c.h.b16 %v365
      %v821 = vunpack.c.l.b16 %v366
      %v822 = vunpack.c.h.b16 %v366
      %v823 = vunpack.c.l.b16 %v367
      %v824 = vunpack.c.h.b16 %v367
      %v825 = vunpack.c.l.b16 %v368
      %v826 = vunpack.c.h.b16 %v368
      %v827 = vunpack.c.l.b16 %v369
      %v828 = vunpack.c.h.b16 %v369
      %v829 = vunpack.c.l.b16 %v370
      %v830 = vunpack.c.h.b16 %v370
      %v831 = vunpack.c.l.b16 %v371
      %v832 = vunpack.c.h.b16 %v371
      %v833 = vunpack.c.l.b16 %v372
      %v834 = vunpack.c.h.b16 %v372
      %v835 = vunpack.c.l.b16 %v373
      %v836 = vunpack.c.h.b16 %v373
      %v837 = vunpack.c.l.b16 %v374
      %v838 = vunpack.c.h.b16 %v374
      %v839 = vunpack.c.l.b16 %v375
      %v840 = vunpack.c.h.b16 %v375
      %v841 = vunpack.c.l.b16 %v376
      %v842 = vunpack.c.h.b16 %v376
      %v843 = vunpack.c.l.b16 %v377
      %v844 = vunpack.c.h.b16 %v377
      %v845 = vunpack.c.l.b16 %v378
      %v846 = vunpack.c.h.b16 %v378
      %v847 = vunpack.c.l.b16 %v379
      %v848 = vunpack.c.h.b16 %v379
      %v849 = vunpack.c.l.b16 %v380
      %v850 = vunpack.c.h.b16 %v380
      %v851 = vunpack.c.l.b16 %v381
      %v852 = vunpack.c.h.b16 %v381
      %v853 = vunpack.c.l.b16 %v382
      %v854 = vunpack.c.h.b16 %v382
      %v855 = vunpack.c.l.b16 %v383
      %v856 = vunpack.c.h.b16 %v383
      %v857 = vunpack.c.l.b16 %v384
      %v858 = vunpack.c.h.b16 %v384
      %v859 = vunpack.c.l.b16 %v385
      %v860 = vunpack.c.h.b16 %v385
      %v861 = vunpack.c.l.b16 %v386
      %v862 = vunpack.c.h.b16 %v386
      %v863 = vunpack.c.l.b16 %v387
      %v864 = vunpack.c.h.b16 %v387
      %v865 = vunpack.c.l.b16 %v388
      %v866 = vunpack.c.h.b16 %v388
      %v867 = vunpack.c.l.b16 %v389
      %v868 = vunpack.c.h.b16 %v389
      %v869 = vunpack.c.l.b16 %v390
      %v870 = vunpack.c.h.b16 %v390
      %v871 = vunpack.c.l.b16 %v391
      %v872 = vunpack.c.h.b16 %v391
      %v873 = vunpack.c.l.b16 %v392
      %v874 = vunpack.c.h.b16 %v392
      %v875 = vunpack.c.l.b16 %v393
      %v876 = vunpack.c.h.b16 %v393
      %v877 = vunpack.c.l.b16 %v394
      %v878 = vunpack.c.h.b16 %v394
      %v879 = vunpack.c.l.b16 %v395
      %v880 = vunpack.c.h.b16 %v395
      %v881 = vunpack.c.l.b16 %v396
      %v882 = vunpack.c.h.b16 %v396
      %v883 = vunpack.c.l.b16 %v397
      %v884 = vunpack.c.h.b16 %v397
      %v885 = vunpack.c.l.b16 %v398
      %v886 = vunpack.c.h.b16 %v398
      %v887 = vunpack.c.l.b16 %v399
      %v888 = vunpack.c.h.b16 %v399
      %v889 = vunpack.c.l.b16 %v400
      %v890 = vunpack.c.h.b16 %v400
      %v891 = vunpack.c.l.b16 %v401
      %v892 = vunpack.c.h.b16 %v401
      %v893 = vunpack.c.l.b16 %v402
      %v894 = vunpack.c.h.b16 %v402
      %v895 = vunpack.c.l.b16 %v403
      %v896 = vunpack.c.h.b16 %v403
      %v897 = vunpack.c.l.b16 %v404
      %v898 = vunpack.c.h.b16 %v404
      %v899 = vunpack.c.l.b16 %v405
      %v900 = vunpack.c.h.b16 %v405
      %v901 = vunpack.c.l.b16 %v406
      %v902 = vunpack.c.h.b16 %v406
      %v903 = vunpack.c.l.b16 %v407
      %v904 = vunpack.c.h.b16 %v407
      %v905 = vunpack.c.l.b16 %v408
      %v906 = vunpack.c.h.b16 %v408
      %v907 = vunpack.c.l.b16 %v409
      %v908 = vunpack.c.h.b16 %v409
      %v909 = vunpack.c.l.b16 %v410
      %v910 = vunpack.c.h.b16 %v410
      %v911 = vunpack.c.l.b16 %v411
      %v912 = vunpack.c.h.b16 %v411
      %v913 = vunpack.c.l.b16 %v412
      %v914 = vunpack.c.h.b16 %v412
      %v915 = vunpack.c.l.b16 %v413
      %v916 = vunpack.c.h.b16 %v413
      %v917 = vunpack.c.l.b16 %v414
      %v918 = vunpack.c.h.b16 %v414
      %v919 = vunpack.c.l.b16 %v415
      %v920 = vunpack.c.h.b16 %v415
      %v921 = vunpack.c.l.b16 %v416
      %v922 = vunpack.c.h.b16 %v416
      %v923 = vunpack.c.l.b16 %v417
      %v924 = vunpack.c.h.b16 %v417
      %v925 = vunpack.c.l.b16 %v418
      %v926 = vunpack.c.h.b16 %v418
      %v927 = vunpack.c.l.b16 %v419
      %v928 = vunpack.c.h.b16 %v419
      %v929 = vunpack.c.l.b16 %v420
      %v930 = vunpack.c.h.b16 %v420
      %v931 = vunpack.c.l.b16 %v421
      %v932 = vunpack.c.h.b16 %v421
      %v933 = vunpack.c.l.b16 %v422
      %v934 = vunpack.c.h.b16 %v422
      %v935 = vunpack.c.l.b16 %v423
      %v936 = vunpack.c.h.b16 %v423
      %v937 = vunpack.c.l.b16 %v424
      %v938 = vunpack.c.h.b16 %v424
      %v939 = vunpack.c.l.b16 %v425
      %v940 = vunpack.c.h.b16 %v425
      %v941 = vunpack.c.l.b16 %v426
      %v942 = vunpack.c.h.b16 %v426
      %v943 = vunpack.c.l.b16 %v427
      %v944 = vunpack.c.h.b16 %v427
      %v945 = vunpack.c.l.b16 %v428
      %v946 = vunpack.c.h.b16 %v428
      %v947 = vunpack.c.l.b16 %v429
      %v948 = vunpack.c.h.b16 %v429
      %v949 = vunpack.c.l.b16 %v430
      %v950 = vunpack.c.h.b16 %v430
      %v951 = vunpack.c.l.b16 %v431
      %v952 = vunpack.c.h.b16 %v431
      %v953 = vunpack.c.l.b16 %v432
      %v954 = vunpack.c.h.b16 %v432
      %v955 = vunpack.c.l.b16 %v433
      %v956 = vunpack.c.h.b16 %v433
      %v957 = vunpack.c.l.b16 %v434
      %v958 = vunpack.c.h.b16 %v434
      %v959 = vunpack.c.l.b16 %v435
      %v960 = vunpack.c.h.b16 %v435
      %v961 = vunpack.c.l.b16 %v436
      %v962 = vunpack.c.h.b16 %v436
      %v963 = vunpack.c.l.b16 %v437
      %v964 = vunpack.c.h.b16 %v437
      %v965 = vunpack.c.l.b16 %v438
      %v966 = vunpack.c.h.b16 %v438
      %v967 = vunpack.c.l.b16 %v439
      %v968 = vunpack.c.h.b16 %v439
      %v969 = vunpack.c.l.b16 %v440
      %v970 = vunpack.c.h.b16 %v440
      %v971 = vunpack.c.l.b16 %v441
      %v972 = vunpack.c.h.b16 %v441
      %v973 = vunpack.c.l.b16 %v442
      %v974 = vunpack.c.h.b16 %v442
      %v975 = vunpack.c.l.b16 %v443
      %v976 = vunpack.c.h.b16 %v443
      %v977 = vunpack.c.l.b16 %v444
      %v978 = vunpack.c.h.b16 %v444
      %v979 = vunpack.c.l.b16 %v445
      %v980 = vunpack.c.h.b16 %v445
      %v981 = vunpack.c.l.b16 %v446
      %v982 = vunpack.c.h.b16 %v446
      %v983 = vunpack.c.l.b16 %v447
      %v984 = vunpack.c.h.b16 %v447
      %v985 = vunpack.c.l.b16 %v448
      %v986 = vunpack.c.h.b16 %v448
      %v987 = vunpack.c.l.b16 %v449
      %v988 = vunpack.c.h.b16 %v449
      %v989 = vunpack.c.l.b16 %v450
      %v990 = vunpack.c.h.b16 %v450
      %v991 = vunpack.c.l.b16 %v451
      %v992 = vunpack.c.h.b16 %v451
      %v993 = vunpack.c.l.b16 %v452
      %v994 = vunpack.c.h.b16 %v452
      %v995 = vunpack.c.l.b16 %v453
      %v996 = vunpack.c.h.b16 %v453
      %v997 = vunpack.c.l.b16 %v454
      %v998 = vunpack.c.h.b16 %v454
      %v999 = vunpack.c.l.b16 %v455
      %v1000 = vunpack.c.h.b16 %v455
      %v1001 = vunpack.c.l.b16 %v456
      %v1002 = vunpack.c.h.b16 %v456
      %v1003 = vunpack.c.l.b16 %v457
      %v1004 = vunpack.c.h.b16 %v457
      %v1005 = vunpack.c.l.b16 %v458
      %v1006 = vunpack.c.h.b16 %v458
      %v1007 = vunpack.c.l.b16 %v459
      %v1008 = vunpack.c.h.b16 %v459
      %v1009 = vunpack.c.l.b16 %v460
      %v1010 = vunpack.c.h.b16 %v460
      %v1011 = vunpack.c.l.b16 %v461
      %v1012 = vunpack.c.h.b16 %v461
      %v1013 = vunpack.c.l.b16 %v462
      %v1014 = vunpack.c.h.b16 %v462
      %v1015 = vunpack.c.l.b16 %v463
      %v1016 = vunpack.c.h.b16 %v463
      %v1017 = vunpack.c.l.b16 %v464
      %v1018 = vunpack.c.h.b16 %v464
      %v1019 = vunpack.c.l.b16 %v465
      %v1020 = vunpack.c.h.b16 %v465
      %v1021 = vunpack.c.l.b16 %v466
      %v1022 = vunpack.c.h.b16 %v466
      %v1023 = vunpack.c.l.b16 %v467
      %v1024 = vunpack.c.h.b16 %v467
      %v1025 = vunpack.c.l.b16 %v468
      %v1026 = vunpack.c.h.b16 %v468
      %v1027 = vunpack.c.l.b16 %v469
      %v1028 = vunpack.c.h.b16 %v469
      %v1029 = vunpack.c.l.b16 %v470
      %v1030 = vunpack.c.h.b16 %v470
      %v1031 = vunpack.c.l.b16 %v471
      %v1032 = vunpack.c.h.b16 %v471
      %v1033 = vunpack.c.l.b16 %v472
      %v1034 = vunpack.c.h.b16 %v472
      %v1035 = vunpack.c.l.b16 %v473
      %v1036 = vunpack.c.h.b16 %v473
      %v1037 = vunpack.c.l.b16 %v474
      %v1038 = vunpack.c.h.b16 %v474
      %v1039 = vunpack.c.l.b16 %v475
      %v1040 = vunpack.c.h.b16 %v475
      %v1041 = vunpack.c.l.b16 %v476
      %v1042 = vunpack.c.h.b16 %v476
      %v1043 = vunpack.c.l.b16 %v477
      %v1044 = vunpack.c.h.b16 %v477
      %v1045 = vunpack.c.l.b16 %v478
      %v1046 = vunpack.c.h.b16 %v478
      %v1047 = vunpack.c.l.b16 %v479
      %v1048 = vunpack.c.h.b16 %v479
      %v1049 = vunpack.c.l.b16 %v480
      %v1050 = vunpack.c.h.b16 %v480
      %v1051 = vunpack.c.l.b16 %v481
      %v1052 = vunpack.c.h.b16 %v481
      %v1053 = vunpack.c.l.b16 %v482
      %v1054 = vunpack.c.h.b16 %v482
      %v1055 = vunpack.c.l.b16 %v483
      %v1056 = vunpack.c.h.b16 %v483
      %v1057 = vunpack.c.l.b16 %v484
      %v1058 = vunpack.c.h.b16 %v484
      %v1059 = vunpack.c.l.b16 %v485
      %v1060 = vunpack.c.h.b16 %v485
      %v1061 = vunpack.c.l.b16 %v486
      %v1062 = vunpack.c.h.b16 %v486
      %v1063 = vunpack.c.l.b16 %v487
      %v1064 = vunpack.c.h.b16 %v487
      %v1065 = vunpack.c.l.b16 %v488
      %v1066 = vunpack.c.h.b16 %v488
      %v1067 = vunpack.c.l.b16 %v489
      %v1068 = vunpack.c.h.b16 %v489
      %v1069 = vunpack.c.l.b16 %v490
      %v1070 = vunpack.c.h.b16 %v490
      %v1071 = vunpack.c.l.b16 %v491
      %v1072 = vunpack.c.h.b16 %v491
      %v1073 = vunpack.c.l.b16 %v492
      %v1074 = vunpack.c.h.b16 %v492
      %v1075 = vunpack.c.l.b16 %v493
      %v1076 = vunpack.c.h.b16 %v493
      %v1077 = vunpack.c.l.b16 %v494
      %v1078 = vunpack.c.h.b16 %v494
      %v1079 = vunpack.c.l.b16 %v495
      %v1080 = vunpack.c.h.b16 %v495
      %v1081 = vunpack.c.l.b16 %v496
      %v1082 = vunpack.c.h.b16 %v496
      %v1083 = vunpack.c.l.b16 %v497
      %v1084 = vunpack.c.h.b16 %v497
      %v1085 = vunpack.c.l.b16 %v498
      %v1086 = vunpack.c.h.b16 %v498
      %v1087 = vunpack.c.l.b16 %v499
      %v1088 = vunpack.c.h.b16 %v499
      %v1089 = vunpack.c.l.b16 %v500
      %v1090 = vunpack.c.h.b16 %v500
      %v1091 = vunpack.c.l.b16 %v501
      %v1092 = vunpack.c.h.b16 %v501
      %v1093 = vunpack.c.l.b16 %v502
      %v1094 = vunpack.c.h.b16 %v502
      %v1095 = vunpack.c.l.b16 %v503
      %v1096 = vunpack.c.h.b16 %v503
      %v1097 = vunpack.c.l.b16 %v504
      %v1098 = vunpack.c.h.b16 %v504
      %v1099 = vunpack.c.l.b16 %v505
      %v1100 = vunpack.c.h.b16 %v505
      %v1101 = vunpack.c.l.b16 %v506
      %v1102 = vunpack.c.h.b16 %v506
      %v1103 = vunpack.c.l.b16 %v507
      %v1104 = vunpack.c.h.b16 %v507
      %v1105 = vunpack.c.l.b16 %v508
      %v1106 = vunpack.c.h.b16 %v508
      %v1107 = vpack.c.b16 %v727, %v723
      %v1108 = vpack.c.b16 %v728, %v724
      %v1109 = vpack.c.b16 %v729, %v725
      %v1110 = vpack.c.b16 %v730, %v726
      %v1111 = vpack.c.b16 %v735, %v731
      %v1112 = vpack.c.b16 %v736, %v732
      %v1113 = vpack.c.b16 %v737, %v733
      %v1114 = vpack.c.b16 %v738, %v734
      %v1115 = vpack.c.b16 %v743, %v739
      %v1116 = vpack.c.b16 %v744, %v740
      %v1117 = vpack.c.b16 %v745, %v741
      %v1118 = vpack.c.b16 %v746, %v742
      %v1119 = vpack.c.b16 %v751, %v747
      %v1120 = vpack.c.b16 %v752, %v748
      %v1121 = vpack.c.b16 %v753, %v749
      %v1122 = vpack.c.b16 %v754, %v750
      %v1123 = vpack.c.b16 %v759, %v755
      %v1124 = vpack.c.b16 %v760, %v756
      %v1125 = vpack.c.b16 %v761, %v757
      %v1126 = vpack.c.b16 %v762, %v758
      %v1127 = vpack.c.b16 %v767, %v763
      %v1128 = vpack.c.b16 %v768, %v764
      %v1129 = vpack.c.b16 %v769, %v765
      %v1130 = vpack.c.b16 %v770, %v766
      %v1131 = vpack.c.b16 %v775, %v771
      %v1132 = vpack.c.b16 %v776, %v772
      %v1133 = vpack.c.b16 %v777, %v773
      %v1134 = vpack.c.b16 %v778, %v774
      %v1135 = vpack.c.b16 %v783, %v779
      %v1136 = vpack.c.b16 %v784, %v780
      %v1137 = vpack.c.b16 %v785, %v781
      %v1138 = vpack.c.b16 %v786, %v782
      %v1139 = vpack.c.b16 %v791, %v787
      %v1140 = vpack.c.b16 %v792, %v788
      %v1141 = vpack.c.b16 %v793, %v789
      %v1142 = vpack.c.b16 %v794, %v790
      %v1143 = vpack.c.b16 %v799, %v795
      %v1144 = vpack.c.b16 %v800, %v796
      %v1145 = vpack.c.b16 %v801, %v797
      %v1146 = vpack.c.b16 %v802, %v798
      %v1147 = vpack.c.b16 %v807, %v803
      %v1148 = vpack.c.b16 %v808, %v804
      %v1149 = vpack.c.b16 %v809, %v805
      %v1150 = vpack.c.b16 %v810, %v806
      %v1151 = vpack.c.b16 %v815, %v811
      %v1152 = vpack.c.b16 %v816, %v812
      %v1153 = vpack.c.b16 %v817, %v813
      %v1154 = vpack.c.b16 %v818, %v814
      %v1155 = vpack.c.b16 %v823, %v819
      %v1156 = vpack.c.b16 %v824, %v820
      %v1157 = vpack.c.b16 %v825, %v821
      %v1158 = vpack.c.b16 %v826, %v822
      %v1159 = vpack.c.b16 %v831, %v827
      %v1160 = vpack.c.b16 %v832, %v828
      %v1161 = vpack.c.b16 %v833, %v829
      %v1162 = vpack.c.b16 %v834, %v830
      %v1163 = vpack.c.b16 %v839, %v835
      %v1164 = vpack.c.b16 %v840, %v836
      %v1165 = vpack.c.b16 %v841, %v837
      %v1166 = vpack.c.b16 %v842, %v838
      %v1167 = vpack.c.b16 %v847, %v843
      %v1168 = vpack.c.b16 %v848, %v844
      %v1169 = vpack.c.b16 %v849, %v845
      %v1170 = vpack.c.b16 %v850, %v846
      %v1171 = vpack.c.b16 %v855, %v851
      %v1172 = vpack.c.b16 %v856, %v852
      %v1173 = vpack.c.b16 %v857, %v853
      %v1174 = vpack.c.b16 %v858, %v854
      %v1175 = vpack.c.b16 %v863, %v859
      %v1176 = vpack.c.b16 %v864, %v860
      %v1177 = vpack.c.b16 %v865, %v861
      %v1178 = vpack.c.b16 %v866, %v862
      %v1179 = vpack.c.b16 %v871, %v867
      %v1180 = vpack.c.b16 %v872, %v868
      %v1181 = vpack.c.b16 %v873, %v869
      %v1182 = vpack.c.b16 %v874, %v870
      %v1183 = vpack.c.b16 %v879, %v875
      %v1184 = vpack.c.b16 %v880, %v876
      %v1185 = vpack.c.b16 %v881, %v877
      %v1186 = vpack.c.b16 %v882, %v878
      %v1187 = vpack.c.b16 %v887, %v883
      %v1188 = vpack.c.b16 %v888, %v884
      %v1189 = vpack.c.b16 %v889, %v885
      %v1190 = vpack.c.b16 %v890, %v886
      %v1191 = vpack.c.b16 %v895, %v891
      %v1192 = vpack.c.b16 %v896, %v892
      %v1193 = vpack.c.b16 %v897, %v893
      %v1194 = vpack.c.b16 %v898, %v894
      %v1195 = vpack.c.b16 %v903, %v899
      %v1196 = vpack.c.b16 %v904, %v900
      %v1197 = vpack.c.b16 %v905, %v901
      %v1198 = vpack.c.b16 %v906, %v902
      %v1199 = vpack.c.b16 %v911, %v907
      %v1200 = vpack.c.b16 %v912, %v908
      %v1201 = vpack.c.b16 %v913, %v909
      %v1202 = vpack.c.b16 %v914, %v910
      %v1203 = vpack.c.b16 %v919, %v915
      %v1204 = vpack.c.b16 %v920, %v916
      %v1205 = vpack.c.b16 %v921, %v917
      %v1206 = vpack.c.b16 %v922, %v918
      %v1207 = vpack.c.b16 %v927, %v923
      %v1208 = vpack.c.b16 %v928, %v924
      %v1209 = vpack.c.b16 %v929, %v925
      %v1210 = vpack.c.b16 %v930, %v926
      %v1211 = vpack.c.b16 %v935, %v931
      %v1212 = vpack.c.b16 %v936, %v932
      %v1213 = vpack.c.b16 %v937, %v933
      %v1214 = vpack.c.b16 %v938, %v934
      %v1215 = vpack.c.b16 %v943, %v939
      %v1216 = vpack.c.b16 %v944, %v940
      %v1217 = vpack.c.b16 %v945, %v941
      %v1218 = vpack.c.b16 %v946, %v942
      %v1219 = vpack.c.b16 %v951, %v947
      %v1220 = vpack.c.b16 %v952, %v948
      %v1221 = vpack.c.b16 %v953, %v949
      %v1222 = vpack.c.b16 %v954, %v950
      %v1223 = vpack.c.b16 %v959, %v955
      %v1224 = vpack.c.b16 %v960, %v956
      %v1225 = vpack.c.b16 %v961, %v957
      %v1226 = vpack.c.b16 %v962, %v958
      %v1227 = vpack.c.b16 %v967, %v963
      %v1228 = vpack.c.b16 %v968, %v964
      %v1229 = vpack.c.b16 %v969, %v965
      %v1230 = vpack.c.b16 %v970, %v966
      %v1231 = vpack.c.b16 %v975, %v971
      %v1232 = vpack.c.b16 %v976, %v972
      %v1233 = vpack.c.b16 %v977, %v973
      %v1234 = vpack.c.b16 %v978, %v974
      %v1235 = vpack.c.b16 %v983, %v979
      %v1236 = vpack.c.b16 %v984, %v980
      %v1237 = vpack.c.b16 %v985, %v981
      %v1238 = vpack.c.b16 %v986, %v982
      %v1239 = vpack.c.b16 %v991, %v987
      %v1240 = vpack.c.b16 %v992, %v988
      %v1241 = vpack.c.b16 %v993, %v989
      %v1242 = vpack.c.b16 %v994, %v990
      %v1243 = vpack.c.b16 %v999, %v995
      %v1244 = vpack.c.b16 %v1000, %v996
      %v1245 = vpack.c.b16 %v1001, %v997
      %v1246 = vpack.c.b16 %v1002, %v998
      %v1247 = vpack.c.b16 %v1007, %v1003
      %v1248 = vpack.c.b16 %v1008, %v1004
      %v1249 = vpack.c.b16 %v1009, %v1005
      %v1250 = vpack.c.b16 %v1010, %v1006
      %v1251 = vpack.c.b16 %v1015, %v1011
      %v1252 = vpack.c.b16 %v1016, %v1012
      %v1253 = vpack.c.b16 %v1017, %v1013
      %v1254 = vpack.c.b16 %v1018, %v1014
      %v1255 = vpack.c.b16 %v1023, %v1019
      %v1256 = vpack.c.b16 %v1024, %v1020
      %v1257 = vpack.c.b16 %v1025, %v1021
      %v1258 = vpack.c.b16 %v1026, %v1022
      %v1259 = vpack.c.b16 %v1031, %v1027
      %v1260 = vpack.c.b16 %v1032, %v1028
      %v1261 = vpack.c.b16 %v1033, %v1029
      %v1262 = vpack.c.b16 %v1034, %v1030
      %v1263 = vpack.c.b16 %v1039, %v1035
      %v1264 = vpack.c.b16 %v1040, %v1036
      %v1265 = vpack.c.b16 %v1041, %v1037
      %v1266 = vpack.c.b16 %v1042, %v1038
      %v1267 = vpack.c.b16 %v1047, %v1043
      %v1268 = vpack.c.b16 %v1048, %v1044
      %v1269 = vpack.c.b16 %v1049, %v1045
      %v1270 = vpack.c.b16 %v1050, %v1046
      %v1271 = vpack.c.b16 %v1055, %v1051
      %v1272 = vpack.c.b16 %v1056, %v1052
      %v1273 = vpack.c.b16 %v1057, %v1053
      %v1274 = vpack.c.b16 %v1058, %v1054
      %v1275 = vpack.c.b16 %v1063, %v1059
      %v1276 = vpack.c.b16 %v1064, %v1060
      %v1277 = vpack.c.b16 %v1065, %v1061
      %v1278 = vpack.c.b16 %v1066, %v1062
      %v1279 = vpack.c.b16 %v1071, %v1067
      %v1280 = vpack.c.b16 %v1072, %v1068
      %v1281 = vpack.c.b16 %v1073, %v1069
      %v1282 = vpack.c.b16 %v1074, %v1070
      %v1283 = vpack.c.b16 %v1079, %v1075
      %v1284 = vpack.c.b16 %v1080, %v1076
      %v1285 = vpack.c.b16 %v1081, %v1077
      %v1286 = vpack.c.b16 %v1082, %v1078
      %v1287 = vpack.c.b16 %v1087, %v1083
      %v1288 = vpack.c.b16 %v1088, %v1084
      %v1289 = vpack.c.b16 %v1089, %v1085
      %v1290 = vpack.c.b16 %v1090, %v1086
      %v1291 = vpack.c.b16 %v1095, %v1091
      %v1292 = vpack.c.b16 %v1096, %v1092
      %v1293 = vpack.c.b16 %v1097, %v1093
      %v1294 = vpack.c.b16 %v1098, %v1094
      %v1295 = vpack.c.b16 %v1103, %v1099
      %v1296 = vpack.c.b16 %v1104, %v1100
      %v1297 = vpack.c.b16 %v1105, %v1101
      %v1298 = vpack.c.b16 %v1106, %v1102
      %1491 = vmatprep.subr.bf16.mxu0 %v1108
      %1492 = vmatpush1.bf16.msra.mxu0 %v1107
      %1493 = vmatprep.subr.bf16.mxu0 %v1112
      %1494 = vmatpush1.bf16.msra.mxu0 %v1111
      %1495 = vmatprep.subr.bf16.mxu0 %v1116
      %1496 = vmatpush1.bf16.msra.mxu0 %v1115
      %1497 = vmatprep.subr.bf16.mxu0 %v1120
      %1498 = vmatpush1.bf16.msra.mxu0 %v1119
      %1499 = vmatprep.subr.bf16.mxu0 %v1124
      %1500 = vmatpush1.bf16.msra.mxu0 %v1123
      %1501 = vmatprep.subr.bf16.mxu0 %v1128
      %1502 = vmatpush1.bf16.msra.mxu0 %v1127
      %1503 = vmatprep.subr.bf16.mxu0 %v1132
      %1504 = vmatpush1.bf16.msra.mxu0 %v1131
      %1505 = vmatprep.subr.bf16.mxu0 %v1136
      %1506 = vmatpush1.bf16.msra.mxu0 %v1135
      %1507 = vmatprep.subr.bf16.mxu0 %v1140
      %1508 = vmatpush1.bf16.msra.mxu0 %v1139
      %1509 = vmatprep.subr.bf16.mxu0 %v1144
      %1510 = vmatpush1.bf16.msra.mxu0 %v1143
      %1511 = vmatprep.subr.bf16.mxu0 %v1148
      %1512 = vmatpush1.bf16.msra.mxu0 %v1147
      %1513 = vmatprep.subr.bf16.mxu0 %v1152
      %1514 = vmatpush1.bf16.msra.mxu0 %v1151
      %1515 = vmatprep.subr.bf16.mxu0 %v1156
      %1516 = vmatpush1.bf16.msra.mxu0 %v1155
      %1517 = vmatprep.subr.bf16.mxu0 %v1160
      %1518 = vmatpush1.bf16.msra.mxu0 %v1159
      %1519 = vmatprep.subr.bf16.mxu0 %v1164
      %1520 = vmatpush1.bf16.msra.mxu0 %v1163
      %1521 = vmatprep.subr.bf16.mxu0 %v1168
      %1522 = vmatpush1.bf16.msra.mxu0 %v1167
      %1523 = vmatprep.mubr.bf16.mxu0 %v312
      %1524 = vmatmul.mubr.bf16.gmra.mrb[0].mxu0 %v311
      %v1525 = vpop.f32.mrb[0].mxu0
      %v1526 = vadd.f32 %v514, %v1525
      %v1527 = vpop.f32.mrb[0].mxu0
      %v1528 = vadd.f32 %v518, %v1527
      %v1529 = vpop.f32.mrb[0].mxu0
      %v1530 = vpop.f32.mrb[0].mxu0
      %1531 = vdwg.mxu0
      %1532 = vmatprep.subr.bf16.mxu0 %v1172
      %1533 = vmatpush1.bf16.msra.mxu0 %v1171
      %1534 = vmatprep.subr.bf16.mxu0 %v1176
      %1535 = vmatpush1.bf16.msra.mxu0 %v1175
      %1536 = vmatprep.subr.bf16.mxu0 %v1180
      %1537 = vmatpush1.bf16.msra.mxu0 %v1179
      %1538 = vmatprep.subr.bf16.mxu0 %v1184
      %1539 = vmatpush1.bf16.msra.mxu0 %v1183
      %1540 = vmatprep.subr.bf16.mxu0 %v1188
      %1541 = vmatpush1.bf16.msra.mxu0 %v1187
      %1542 = vmatprep.subr.bf16.mxu0 %v1192
      %1543 = vmatpush1.bf16.msra.mxu0 %v1191
      %1544 = vmatprep.subr.bf16.mxu0 %v1196
      %1545 = vmatpush1.bf16.msra.mxu0 %v1195
      %1546 = vmatprep.subr.bf16.mxu0 %v1200
      %1547 = vmatpush1.bf16.msra.mxu0 %v1199
      %1548 = vmatprep.subr.bf16.mxu0 %v1204
      %1549 = vmatpush1.bf16.msra.mxu0 %v1203
      %1550 = vmatprep.subr.bf16.mxu0 %v1208
      %1551 = vmatpush1.bf16.msra.mxu0 %v1207
      %1552 = vmatprep.subr.bf16.mxu0 %v1212
      %1553 = vmatpush1.bf16.msra.mxu0 %v1211
      %1554 = vmatprep.subr.bf16.mxu0 %v1216
      %1555 = vmatpush1.bf16.msra.mxu0 %v1215
      %1556 = vmatprep.subr.bf16.mxu0 %v1220
      %1557 = vmatpush1.bf16.msra.mxu0 %v1219
      %1558 = vmatprep.subr.bf16.mxu0 %v1224
      %1559 = vmatpush1.bf16.msra.mxu0 %v1223
      %1560 = vmatprep.subr.bf16.mxu0 %v1228
      %1561 = vmatpush1.bf16.msra.mxu0 %v1227
      %1562 = vmatprep.subr.bf16.mxu0 %v1232
      %1563 = vmatpush1.bf16.msra.mxu0 %v1231
      %1564 = vmatprep.mubr.bf16.mxu0 %v314
      %1565 = vmatmul.mubr.bf16.gmra.mrb[0].mxu0 %v313
      %v1566 = vpop.f32.mrb[0].mxu0
      %v1567 = vadd.f32 %v1526, %v1566
      %v1568 = vpop.f32.mrb[0].mxu0
      %v1569 = vadd.f32 %v1528, %v1568
      %v1570 = vpop.f32.mrb[0].mxu0
      %v1571 = vpop.f32.mrb[0].mxu0
      %1572 = vdwg.mxu0
      %1573 = vmatprep.subr.bf16.mxu0 %v1236
      %1574 = vmatpush1.bf16.msra.mxu0 %v1235
      %1575 = vmatprep.subr.bf16.mxu0 %v1240
      %1576 = vmatpush1.bf16.msra.mxu0 %v1239
      %1577 = vmatprep.subr.bf16.mxu0 %v1244
      %1578 = vmatpush1.bf16.msra.mxu0 %v1243
      %1579 = vmatprep.subr.bf16.mxu0 %v1248
      %1580 = vmatpush1.bf16.msra.mxu0 %v1247
      %1581 = vmatprep.subr.bf16.mxu0 %v1252
      %1582 = vmatpush1.bf16.msra.mxu0 %v1251
      %1583 = vmatprep.subr.bf16.mxu0 %v1256
      %1584 = vmatpush1.bf16.msra.mxu0 %v1255
      %1585 = vmatprep.subr.bf16.mxu0 %v1260
      %1586 = vmatpush1.bf16.msra.mxu0 %v1259
      %1587 = vmatprep.subr.bf16.mxu0 %v1264
      %1588 = vmatpush1.bf16.msra.mxu0 %v1263
      %1589 = vmatprep.subr.bf16.mxu0 %v1268
      %1590 = vmatpush1.bf16.msra.mxu0 %v1267
      %1591 = vmatprep.subr.bf16.mxu0 %v1272
      %1592 = vmatpush1.bf16.msra.mxu0 %v1271
      %1593 = vmatprep.subr.bf16.mxu0 %v1276
      %1594 = vmatpush1.bf16.msra.mxu0 %v1275
      %1595 = vmatprep.subr.bf16.mxu0 %v1280
      %1596 = vmatpush1.bf16.msra.mxu0 %v1279
      %1597 = vmatprep.subr.bf16.mxu0 %v1284
      %1598 = vmatpush1.bf16.msra.mxu0 %v1283
      %1599 = vmatprep.subr.bf16.mxu0 %v1288
      %1600 = vmatpush1.bf16.msra.mxu0 %v1287
      %1601 = vmatprep.subr.bf16.mxu0 %v1292
      %1602 = vmatpush1.bf16.msra.mxu0 %v1291
      %1603 = vmatprep.subr.bf16.mxu0 %v1296
      %1604 = vmatpush1.bf16.msra.mxu0 %v1295
      %1605 = vmatprep.mubr.bf16.mxu0 %v316
      %1606 = vmatmul.mubr.bf16.gmra.mrb[0].mxu0 %v315
      %v1607 = vpop.f32.mrb[0].mxu0
      %v1608 = vadd.f32 %v1567, %v1607
      %v1609 = vpop.f32.mrb[0].mxu0
      %v1610 = vadd.f32 %v1569, %v1609
      %v1611 = vpop.f32.mrb[0].mxu0
      %v1612 = vpop.f32.mrb[0].mxu0
      %1613 = vdwg.mxu0
      %1614 = vmatprep.subr.bf16.mxu0 %v1110
      %1615 = vmatpush1.bf16.msra.mxu0 %v1109
      %1616 = vmatprep.subr.bf16.mxu0 %v1114
      %1617 = vmatpush1.bf16.msra.mxu0 %v1113
      %1618 = vmatprep.subr.bf16.mxu0 %v1118
      %1619 = vmatpush1.bf16.msra.mxu0 %v1117
      %1620 = vmatprep.subr.bf16.mxu0 %v1122
      %1621 = vmatpush1.bf16.msra.mxu0 %v1121
      %1622 = vmatprep.subr.bf16.mxu0 %v1126
      %1623 = vmatpush1.bf16.msra.mxu0 %v1125
      %1624 = vmatprep.subr.bf16.mxu0 %v1130
      %1625 = vmatpush1.bf16.msra.mxu0 %v1129
      %1626 = vmatprep.subr.bf16.mxu0 %v1134
      %1627 = vmatpush1.bf16.msra.mxu0 %v1133
      %1628 = vmatprep.subr.bf16.mxu0 %v1138
      %1629 = vmatpush1.bf16.msra.mxu0 %v1137
      %1630 = vmatprep.subr.bf16.mxu0 %v1142
      %1631 = vmatpush1.bf16.msra.mxu0 %v1141
      %1632 = vmatprep.subr.bf16.mxu0 %v1146
      %1633 = vmatpush1.bf16.msra.mxu0 %v1145
      %1634 = vmatprep.subr.bf16.mxu0 %v1150
      %1635 = vmatpush1.bf16.msra.mxu0 %v1149
      %1636 = vmatprep.subr.bf16.mxu0 %v1154
      %1637 = vmatpush1.bf16.msra.mxu0 %v1153
      %1638 = vmatprep.subr.bf16.mxu0 %v1158
      %1639 = vmatpush1.bf16.msra.mxu0 %v1157
      %1640 = vmatprep.subr.bf16.mxu0 %v1162
      %1641 = vmatpush1.bf16.msra.mxu0 %v1161
      %1642 = vmatprep.subr.bf16.mxu0 %v1166
      %1643 = vmatpush1.bf16.msra.mxu0 %v1165
      %1644 = vmatprep.subr.bf16.mxu0 %v1170
      %1645 = vmatpush1.bf16.msra.mxu0 %v1169
      %1646 = vmatprep.mubr.bf16.mxu0 %v312
      %1647 = vmatmul.mubr.bf16.gmra.mrb[0].mxu0 %v311
      %v1648 = vpop.f32.mrb[0].mxu0
      %v1649 = vadd.f32 %v522, %v1648
      %v1650 = vpop.f32.mrb[0].mxu0
      %v1651 = vadd.f32 %v526, %v1650
      %v1652 = vpop.f32.mrb[0].mxu0
      %v1653 = vpop.f32.mrb[0].mxu0
      %1654 = vdwg.mxu0
      %1655 = vmatprep.subr.bf16.mxu0 %v1174
      %1656 = vmatpush1.bf16.msra.mxu0 %v1173
      %1657 = vmatprep.subr.bf16.mxu0 %v1178
      %1658 = vmatpush1.bf16.msra.mxu0 %v1177
      %1659 = vmatprep.subr.bf16.mxu0 %v1182
      %1660 = vmatpush1.bf16.msra.mxu0 %v1181
      %1661 = vmatprep.subr.bf16.mxu0 %v1186
      %1662 = vmatpush1.bf16.msra.mxu0 %v1185
      %1663 = vmatprep.subr.bf16.mxu0 %v1190
      %1664 = vmatpush1.bf16.msra.mxu0 %v1189
      %1665 = vmatprep.subr.bf16.mxu0 %v1194
      %1666 = vmatpush1.bf16.msra.mxu0 %v1193
      %1667 = vmatprep.subr.bf16.mxu0 %v1198
      %1668 = vmatpush1.bf16.msra.mxu0 %v1197
      %1669 = vmatprep.subr.bf16.mxu0 %v1202
      %1670 = vmatpush1.bf16.msra.mxu0 %v1201
      %1671 = vmatprep.subr.bf16.mxu0 %v1206
      %1672 = vmatpush1.bf16.msra.mxu0 %v1205
      %1673 = vmatprep.subr.bf16.mxu0 %v1210
      %1674 = vmatpush1.bf16.msra.mxu0 %v1209
      %1675 = vmatprep.subr.bf16.mxu0 %v1214
      %1676 = vmatpush1.bf16.msra.mxu0 %v1213
      %1677 = vmatprep.subr.bf16.mxu0 %v1218
      %1678 = vmatpush1.bf16.msra.mxu0 %v1217
      %1679 = vmatprep.subr.bf16.mxu0 %v1222
      %1680 = vmatpush1.bf16.msra.mxu0 %v1221
      %1681 = vmatprep.subr.bf16.mxu0 %v1226
      %1682 = vmatpush1.bf16.msra.mxu0 %v1225
      %1683 = vmatprep.subr.bf16.mxu0 %v1230
      %1684 = vmatpush1.bf16.msra.mxu0 %v1229
      %1685 = vmatprep.subr.bf16.mxu0 %v1234
      %1686 = vmatpush1.bf16.msra.mxu0 %v1233
      %1687 = vmatprep.mubr.bf16.mxu0 %v314
      %1688 = vmatmul.mubr.bf16.gmra.mrb[0].mxu0 %v313
      %v1689 = vpop.f32.mrb[0].mxu0
      %v1690 = vadd.f32 %v1649, %v1689
      %v1691 = vpop.f32.mrb[0].mxu0
      %v1692 = vadd.f32 %v1651, %v1691
      %v1693 = vpop.f32.mrb[0].mxu0
      %v1694 = vpop.f32.mrb[0].mxu0
      %1695 = vdwg.mxu0
      %1696 = vmatprep.subr.bf16.mxu0 %v1238
      %1697 = vmatpush1.bf16.msra.mxu0 %v1237
      %1698 = vmatprep.subr.bf16.mxu0 %v1242
      %1699 = vmatpush1.bf16.msra.mxu0 %v1241
      %1700 = vmatprep.subr.bf16.mxu0 %v1246
      %1701 = vmatpush1.bf16.msra.mxu0 %v1245
      %1702 = vmatprep.subr.bf16.mxu0 %v1250
      %1703 = vmatpush1.bf16.msra.mxu0 %v1249
      %1704 = vmatprep.subr.bf16.mxu0 %v1254
      %1705 = vmatpush1.bf16.msra.mxu0 %v1253
      %1706 = vmatprep.subr.bf16.mxu0 %v1258
      %1707 = vmatpush1.bf16.msra.mxu0 %v1257
      %1708 = vmatprep.subr.bf16.mxu0 %v1262
      %1709 = vmatpush1.bf16.msra.mxu0 %v1261
      %1710 = vmatprep.subr.bf16.mxu0 %v1266
      %1711 = vmatpush1.bf16.msra.mxu0 %v1265
      %1712 = vmatprep.subr.bf16.mxu0 %v1270
      %1713 = vmatpush1.bf16.msra.mxu0 %v1269
      %1714 = vmatprep.subr.bf16.mxu0 %v1274
      %1715 = vmatpush1.bf16.msra.mxu0 %v1273
      %1716 = vmatprep.subr.bf16.mxu0 %v1278
      %1717 = vmatpush1.bf16.msra.mxu0 %v1277
      %1718 = vmatprep.subr.bf16.mxu0 %v1282
      %1719 = vmatpush1.bf16.msra.mxu0 %v1281
      %1720 = vmatprep.subr.bf16.mxu0 %v1286
      %1721 = vmatpush1.bf16.msra.mxu0 %v1285
      %1722 = vmatprep.subr.bf16.mxu0 %v1290
      %1723 = vmatpush1.bf16.msra.mxu0 %v1289
      %1724 = vmatprep.subr.bf16.mxu0 %v1294
      %1725 = vmatpush1.bf16.msra.mxu0 %v1293
      %1726 = vmatprep.subr.bf16.mxu0 %v1298
      %1727 = vmatpush1.bf16.msra.mxu0 %v1297
      %1728 = vmatprep.mubr.bf16.mxu0 %v316
      %1729 = vmatmul.mubr.bf16.gmra.mrb[0].mxu0 %v315
      %v1730 = vpop.f32.mrb[0].mxu0
      %v1731 = vadd.f32 %v1690, %v1730
      %v1732 = vpop.f32.mrb[0].mxu0
      %v1733 = vadd.f32 %v1692, %v1732
      %v1734 = vpop.f32.mrb[0].mxu0
      %v1735 = vpop.f32.mrb[0].mxu0
      %1736 = vdwg.mxu0
      %v1737 = vmax.f32 %v1608, 0.0
      %v1738 = vmax.f32 %v1610, 0.0
      %v1739 = vmax.f32 %v1731, 0.0
      %v1740 = vmax.f32 %v1733, 0.0
      %v1741 = vpack.c.bf16 %v1737, %v1737
      %v1742 = vpack.c.bf16 %v1738, %v1738
      %v1743 = vpack.c.bf16 %v1739, %v1739
      %v1744 = vpack.c.bf16 %v1740, %v1740
      %v1745 = vld [vmem:[#allocation10] sm:$0xf]
      %v1746 = vld [vmem:[#allocation10 + $0x4] sm:$0xf]
      %v1747 = vld [vmem:[#allocation10 + $0x8] sm:$0xf]
      %v1748 = vld [vmem:[#allocation10 + $0xc] sm:$0xf]
      %v1749 = vld [vmem:[#allocation10 + $0x10] sm:$0xf]
      %v1750 = vld [vmem:[#allocation10 + $0x14] sm:$0xf]
      %v1751 = vld [vmem:[#allocation10 + $0x18] sm:$0xf]
      %v1752 = vld [vmem:[#allocation10 + $0x1c] sm:$0xf]
      %v1753 = vld [vmem:[#allocation10 + $0x20] sm:$0xf]
      %v1754 = vld [vmem:[#allocation10 + $0x24] sm:$0xf]
      %v1755 = vld [vmem:[#allocation10 + $0x28] sm:$0xf]
      %v1756 = vld [vmem:[#allocation10 + $0x2c] sm:$0xf]
      %v1757 = vld [vmem:[#allocation10 + $0x30] sm:$0xf]
      %v1758 = vld [vmem:[#allocation10 + $0x34] sm:$0xf]
      %v1759 = vld [vmem:[#allocation10 + $0x38] sm:$0xf]
      %v1760 = vld [vmem:[#allocation10 + $0x3c] sm:$0xf]
      %v1761 = vld [vmem:[#allocation10 + $0x40] sm:$0xf]
      %v1762 = vld [vmem:[#allocation10 + $0x44] sm:$0xf]
      %v1763 = vld [vmem:[#allocation10 + $0x48] sm:$0xf]
      %v1764 = vld [vmem:[#allocation10 + $0x4c] sm:$0xf]
      %v1765 = vld [vmem:[#allocation10 + $0x50] sm:$0xf]
      %v1766 = vld [vmem:[#allocation10 + $0x54] sm:$0xf]
      %v1767 = vld [vmem:[#allocation10 + $0x58] sm:$0xf]
      %v1768 = vld [vmem:[#allocation10 + $0x5c] sm:$0xf]
      %v1769 = vld [vmem:[#allocation10 + $0x60] sm:$0xf]
      %v1770 = vld [vmem:[#allocation10 + $0x64] sm:$0xf]
      %v1771 = vld [vmem:[#allocation10 + $0x68] sm:$0xf]
      %v1772 = vld [vmem:[#allocation10 + $0x6c] sm:$0xf]
      %v1773 = vld [vmem:[#allocation10 + $0x70] sm:$0xf]
      %v1774 = vld [vmem:[#allocation10 + $0x74] sm:$0xf]
      %v1775 = vld [vmem:[#allocation10 + $0x78] sm:$0xf]
      %v1776 = vld [vmem:[#allocation10 + $0x7c] sm:$0xf]
      %v1777 = vld [vmem:[#allocation10 + $0x80] sm:$0xf]
      %v1778 = vld [vmem:[#allocation10 + $0x84] sm:$0xf]
      %v1779 = vld [vmem:[#allocation10 + $0x88] sm:$0xf]
      %v1780 = vld [vmem:[#allocation10 + $0x8c] sm:$0xf]
      %v1781 = vld [vmem:[#allocation10 + $0x90] sm:$0xf]
      %v1782 = vld [vmem:[#allocation10 + $0x94] sm:$0xf]
      %v1783 = vld [vmem:[#allocation10 + $0x98] sm:$0xf]
      %v1784 = vld [vmem:[#allocation10 + $0x9c] sm:$0xf]
      %v1785 = vld [vmem:[#allocation10 + $0xa0] sm:$0xf]
      %v1786 = vld [vmem:[#allocation10 + $0xa4] sm:$0xf]
      %v1787 = vld [vmem:[#allocation10 + $0xa8] sm:$0xf]
      %v1788 = vld [vmem:[#allocation10 + $0xac] sm:$0xf]
      %v1789 = vld [vmem:[#allocation10 + $0xb0] sm:$0xf]
      %v1790 = vld [vmem:[#allocation10 + $0xb4] sm:$0xf]
      %v1791 = vld [vmem:[#allocation10 + $0xb8] sm:$0xf]
      %v1792 = vld [vmem:[#allocation10 + $0xbc] sm:$0xf]
      %v1793 = vld [vmem:[#allocation10 + $0xc0] sm:$0xf]
      %v1794 = vld [vmem:[#allocation10 + $0xc4] sm:$0xf]
      %v1795 = vld [vmem:[#allocation10 + $0xc8] sm:$0xf]
      %v1796 = vld [vmem:[#allocation10 + $0xcc] sm:$0xf]
      %v1797 = vld [vmem:[#allocation10 + $0xd0] sm:$0xf]
      %v1798 = vld [vmem:[#allocation10 + $0xd4] sm:$0xf]
      %v1799 = vld [vmem:[#allocation10 + $0xd8] sm:$0xf]
      %v1800 = vld [vmem:[#allocation10 + $0xdc] sm:$0xf]
      %v1801 = vld [vmem:[#allocation10 + $0xe0] sm:$0xf]
      %v1802 = vld [vmem:[#allocation10 + $0xe4] sm:$0xf]
      %v1803 = vld [vmem:[#allocation10 + $0xe8] sm:$0xf]
      %v1804 = vld [vmem:[#allocation10 + $0xec] sm:$0xf]
      %v1805 = vld [vmem:[#allocation10 + $0xf0] sm:$0xf]
      %v1806 = vld [vmem:[#allocation10 + $0xf4] sm:$0xf]
      %v1807 = vld [vmem:[#allocation10 + $0xf8] sm:$0xf]
      %v1808 = vld [vmem:[#allocation10 + $0xfc] sm:$0xf]
      %v1809 = vld [vmem:[%s5] sm:$0x1]
      %v1811 = vlaneseq
      %v1812 = vshrl.u32 %v1811, 7
      %v1813 = vsub.s32 0, %v1812
      %v1814 = vrot.slane %v1809, %v1813
      %v1880 = vunpack.c.l.b16 %v1745
      %v1881 = vunpack.c.l.b16 %v1746
      %v1882 = vunpack.c.l.b16 %v1747
      %v1883 = vunpack.c.l.b16 %v1748
      %v1884 = vunpack.c.l.b16 %v1749
      %v1885 = vunpack.c.l.b16 %v1750
      %v1886 = vunpack.c.l.b16 %v1751
      %v1887 = vunpack.c.l.b16 %v1752
      %v1888 = vunpack.c.l.b16 %v1753
      %v1889 = vunpack.c.l.b16 %v1754
      %v1890 = vunpack.c.l.b16 %v1755
      %v1891 = vunpack.c.l.b16 %v1756
      %v1892 = vunpack.c.l.b16 %v1757
      %v1893 = vunpack.c.l.b16 %v1758
      %v1894 = vunpack.c.l.b16 %v1759
      %v1895 = vunpack.c.l.b16 %v1760
      %v1896 = vunpack.c.l.b16 %v1761
      %v1897 = vunpack.c.l.b16 %v1762
      %v1898 = vunpack.c.l.b16 %v1763
      %v1899 = vunpack.c.l.b16 %v1764
      %v1900 = vunpack.c.l.b16 %v1765
      %v1901 = vunpack.c.l.b16 %v1766
      %v1902 = vunpack.c.l.b16 %v1767
      %v1903 = vunpack.c.l.b16 %v1768
      %v1904 = vunpack.c.l.b16 %v1769
      %v1905 = vunpack.c.l.b16 %v1770
      %v1906 = vunpack.c.l.b16 %v1771
      %v1907 = vunpack.c.l.b16 %v1772
      %v1908 = vunpack.c.l.b16 %v1773
      %v1909 = vunpack.c.l.b16 %v1774
      %v1910 = vunpack.c.l.b16 %v1775
      %v1911 = vunpack.c.l.b16 %v1776
      %v1912 = vunpack.c.l.b16 %v1777
      %v1913 = vunpack.c.l.b16 %v1778
      %v1914 = vunpack.c.l.b16 %v1779
      %v1915 = vunpack.c.l.b16 %v1780
      %v1916 = vunpack.c.l.b16 %v1781
      %v1917 = vunpack.c.l.b16 %v1782
      %v1918 = vunpack.c.l.b16 %v1783
      %v1919 = vunpack.c.l.b16 %v1784
      %v1920 = vunpack.c.l.b16 %v1785
      %v1921 = vunpack.c.l.b16 %v1786
      %v1922 = vunpack.c.l.b16 %v1787
      %v1923 = vunpack.c.l.b16 %v1788
      %v1924 = vunpack.c.l.b16 %v1789
      %v1925 = vunpack.c.l.b16 %v1790
      %v1926 = vunpack.c.l.b16 %v1791
      %v1927 = vunpack.c.l.b16 %v1792
      %v1928 = vunpack.c.l.b16 %v1793
      %v1929 = vunpack.c.l.b16 %v1794
      %v1930 = vunpack.c.l.b16 %v1795
      %v1931 = vunpack.c.l.b16 %v1796
      %v1932 = vunpack.c.l.b16 %v1797
      %v1933 = vunpack.c.l.b16 %v1798
      %v1934 = vunpack.c.l.b16 %v1799
      %v1935 = vunpack.c.l.b16 %v1800
      %v1936 = vunpack.c.l.b16 %v1801
      %v1937 = vunpack.c.l.b16 %v1802
      %v1938 = vunpack.c.l.b16 %v1803
      %v1939 = vunpack.c.l.b16 %v1804
      %v1940 = vunpack.c.l.b16 %v1805
      %v1941 = vunpack.c.l.b16 %v1806
      %v1942 = vunpack.c.l.b16 %v1807
      %v1943 = vunpack.c.l.b16 %v1808
      %v1944 = vpack.c.b16 %v1881, %v1880
      %v1945 = vpack.c.b16 %v1883, %v1882
      %v1946 = vpack.c.b16 %v1885, %v1884
      %v1947 = vpack.c.b16 %v1887, %v1886
      %v1948 = vpack.c.b16 %v1889, %v1888
      %v1949 = vpack.c.b16 %v1891, %v1890
      %v1950 = vpack.c.b16 %v1893, %v1892
      %v1951 = vpack.c.b16 %v1895, %v1894
      %v1952 = vpack.c.b16 %v1897, %v1896
      %v1953 = vpack.c.b16 %v1899, %v1898
      %v1954 = vpack.c.b16 %v1901, %v1900
      %v1955 = vpack.c.b16 %v1903, %v1902
      %v1956 = vpack.c.b16 %v1905, %v1904
      %v1957 = vpack.c.b16 %v1907, %v1906
      %v1958 = vpack.c.b16 %v1909, %v1908
      %v1959 = vpack.c.b16 %v1911, %v1910
      %v1960 = vpack.c.b16 %v1913, %v1912
      %v1961 = vpack.c.b16 %v1915, %v1914
      %v1962 = vpack.c.b16 %v1917, %v1916
      %v1963 = vpack.c.b16 %v1919, %v1918
      %v1964 = vpack.c.b16 %v1921, %v1920
      %v1965 = vpack.c.b16 %v1923, %v1922
      %v1966 = vpack.c.b16 %v1925, %v1924
      %v1967 = vpack.c.b16 %v1927, %v1926
      %v1968 = vpack.c.b16 %v1929, %v1928
      %v1969 = vpack.c.b16 %v1931, %v1930
      %v1970 = vpack.c.b16 %v1933, %v1932
      %v1971 = vpack.c.b16 %v1935, %v1934
      %v1972 = vpack.c.b16 %v1937, %v1936
      %v1973 = vpack.c.b16 %v1939, %v1938
      %v1974 = vpack.c.b16 %v1941, %v1940
      %v1975 = vpack.c.b16 %v1943, %v1942
      %2008 = vmatprep.subr.bf16.mxu0 0
      %2009 = vmatpush1.bf16.msra.mxu0 %v1944
      %2010 = vmatprep.subr.bf16.mxu0 0
      %2011 = vmatpush1.bf16.msra.mxu0 %v1945
      %2012 = vmatprep.subr.bf16.mxu0 0
      %2013 = vmatpush1.bf16.msra.mxu0 %v1946
      %2014 = vmatprep.subr.bf16.mxu0 0
      %2015 = vmatpush1.bf16.msra.mxu0 %v1947
      %2016 = vmatprep.subr.bf16.mxu0 0
      %2017 = vmatpush1.bf16.msra.mxu0 %v1948
      %2018 = vmatprep.subr.bf16.mxu0 0
      %2019 = vmatpush1.bf16.msra.mxu0 %v1949
      %2020 = vmatprep.subr.bf16.mxu0 0
      %2021 = vmatpush1.bf16.msra.mxu0 %v1950
      %2022 = vmatprep.subr.bf16.mxu0 0
      %2023 = vmatpush1.bf16.msra.mxu0 %v1951
      %2024 = vmatprep.subr.bf16.mxu0 0
      %2025 = vmatpush1.bf16.msra.mxu0 %v1952
      %2026 = vmatprep.subr.bf16.mxu0 0
      %2027 = vmatpush1.bf16.msra.mxu0 %v1953
      %2028 = vmatprep.subr.bf16.mxu0 0
      %2029 = vmatpush1.bf16.msra.mxu0 %v1954
      %2030 = vmatprep.subr.bf16.mxu0 0
      %2031 = vmatpush1.bf16.msra.mxu0 %v1955
      %2032 = vmatprep.subr.bf16.mxu0 0
      %2033 = vmatpush1.bf16.msra.mxu0 %v1956
      %2034 = vmatprep.subr.bf16.mxu0 0
      %2035 = vmatpush1.bf16.msra.mxu0 %v1957
      %2036 = vmatprep.subr.bf16.mxu0 0
      %2037 = vmatpush1.bf16.msra.mxu0 %v1958
      %2038 = vmatprep.subr.bf16.mxu0 0
      %2039 = vmatpush1.bf16.msra.mxu0 %v1959
      %2040 = vmatprep.mubr.bf16.mxu0 %v1742
      %2041 = vmatmul.mubr.bf16.gmra.mrb[0].mxu0 %v1741
      %v2042 = vpop.f32.mrb[0].mxu0
      %v2043 = vadd.f32 %v1814, %v2042
      %v2044 = vpop.f32.mrb[0].mxu0
      %v2045 = vpop.f32.mrb[0].mxu0
      %v2046 = vpop.f32.mrb[0].mxu0
      %2047 = vdwg.mxu0
      %2048 = vmatprep.subr.bf16.mxu0 0
      %2049 = vmatpush1.bf16.msra.mxu0 %v1960
      %2050 = vmatprep.subr.bf16.mxu0 0
      %2051 = vmatpush1.bf16.msra.mxu0 %v1961
      %2052 = vmatprep.subr.bf16.mxu0 0
      %2053 = vmatpush1.bf16.msra.mxu0 %v1962
      %2054 = vmatprep.subr.bf16.mxu0 0
      %2055 = vmatpush1.bf16.msra.mxu0 %v1963
      %2056 = vmatprep.subr.bf16.mxu0 0
      %2057 = vmatpush1.bf16.msra.mxu0 %v1964
      %2058 = vmatprep.subr.bf16.mxu0 0
      %2059 = vmatpush1.bf16.msra.mxu0 %v1965
      %2060 = vmatprep.subr.bf16.mxu0 0
      %2061 = vmatpush1.bf16.msra.mxu0 %v1966
      %2062 = vmatprep.subr.bf16.mxu0 0
      %2063 = vmatpush1.bf16.msra.mxu0 %v1967
      %2064 = vmatprep.subr.bf16.mxu0 0
      %2065 = vmatpush1.bf16.msra.mxu0 %v1968
      %2066 = vmatprep.subr.bf16.mxu0 0
      %2067 = vmatpush1.bf16.msra.mxu0 %v1969
      %2068 = vmatprep.subr.bf16.mxu0 0
      %2069 = vmatpush1.bf16.msra.mxu0 %v1970
      %2070 = vmatprep.subr.bf16.mxu0 0
      %2071 = vmatpush1.bf16.msra.mxu0 %v1971
      %2072 = vmatprep.subr.bf16.mxu0 0
      %2073 = vmatpush1.bf16.msra.mxu0 %v1972
      %2074 = vmatprep.subr.bf16.mxu0 0
      %2075 = vmatpush1.bf16.msra.mxu0 %v1973
      %2076 = vmatprep.subr.bf16.mxu0 0
      %2077 = vmatpush1.bf16.msra.mxu0 %v1974
      %2078 = vmatprep.subr.bf16.mxu0 0
      %2079 = vmatpush1.bf16.msra.mxu0 %v1975
      %2080 = vmatprep.mubr.bf16.mxu0 %v1744
      %2081 = vmatmul.mubr.bf16.gmra.mrb[0].mxu0 %v1743
      %v2082 = vpop.f32.mrb[0].mxu0
      %v2083 = vadd.f32 %v2043, %v2082
      %v2084 = vpop.f32.mrb[0].mxu0
      %v2085 = vpop.f32.mrb[0].mxu0
      %v2086 = vpop.f32.mrb[0].mxu0
      %2087 = vdwg.mxu0
      %v2088 = vmax.f32 %v2083, 0.0
      %v2089 = vpack.c.bf16 %v2088, %v2088
      %v2090 = vld [vmem:[#allocation11] sm:$0xf]
      %v2091 = vld [vmem:[#allocation11 + $0x4] sm:$0xf]
      %v2092 = vld [vmem:[#allocation11 + $0x8] sm:$0xf]
      %v2093 = vld [vmem:[#allocation11 + $0xc] sm:$0xf]
      %v2094 = vld [vmem:[#allocation11 + $0x10] sm:$0xf]
      %v2095 = vld [vmem:[#allocation11 + $0x14] sm:$0xf]
      %v2096 = vld [vmem:[#allocation11 + $0x18] sm:$0xf]
      %v2097 = vld [vmem:[#allocation11 + $0x1c] sm:$0xf]
      %v2098 = vld [vmem:[#allocation11 + $0x20] sm:$0xf]
      %v2099 = vld [vmem:[#allocation11 + $0x24] sm:$0xf]
      %v2100 = vld [vmem:[#allocation11 + $0x28] sm:$0xf]
      %v2101 = vld [vmem:[#allocation11 + $0x2c] sm:$0xf]
      %v2102 = vld [vmem:[#allocation11 + $0x30] sm:$0xf]
      %v2103 = vld [vmem:[#allocation11 + $0x34] sm:$0xf]
      %v2104 = vld [vmem:[#allocation11 + $0x38] sm:$0xf]
      %v2105 = vld [vmem:[#allocation11 + $0x3c] sm:$0xf]
      %v2106 = vld [vmem:[%s7] sm:$0x1]
      %v2108 = vlaneseq
      %v2109 = vshrl.u32 %v2108, 7
      %v2110 = vsub.s32 0, %v2109
      %v2111 = vrot.slane %v2106, %v2110
      %v2129 = vunpack.c.l.b16 %v2090
      %v2130 = vunpack.c.l.b16 %v2091
      %v2131 = vunpack.c.l.b16 %v2092
      %v2132 = vunpack.c.l.b16 %v2093
      %v2133 = vunpack.c.l.b16 %v2094
      %v2134 = vunpack.c.l.b16 %v2095
      %v2135 = vunpack.c.l.b16 %v2096
      %v2136 = vunpack.c.l.b16 %v2097
      %v2137 = vunpack.c.l.b16 %v2098
      %v2138 = vunpack.c.l.b16 %v2099
      %v2139 = vunpack.c.l.b16 %v2100
      %v2140 = vunpack.c.l.b16 %v2101
      %v2141 = vunpack.c.l.b16 %v2102
      %v2142 = vunpack.c.l.b16 %v2103
      %v2143 = vunpack.c.l.b16 %v2104
      %v2144 = vunpack.c.l.b16 %v2105
      %v2145 = vpack.c.b16 %v2130, %v2129
      %v2146 = vpack.c.b16 %v2132, %v2131
      %v2147 = vpack.c.b16 %v2134, %v2133
      %v2148 = vpack.c.b16 %v2136, %v2135
      %v2149 = vpack.c.b16 %v2138, %v2137
      %v2150 = vpack.c.b16 %v2140, %v2139
      %v2151 = vpack.c.b16 %v2142, %v2141
      %v2152 = vpack.c.b16 %v2144, %v2143
      %2161 = vmatprep.subr.bf16.mxu0 0
      %2162 = vmatpush1.bf16.msra.mxu0 %v2145
      %2163 = vmatprep.subr.bf16.mxu0 0
      %2164 = vmatpush1.bf16.msra.mxu0 %v2146
      %2165 = vmatprep.subr.bf16.mxu0 0
      %2166 = vmatpush1.bf16.msra.mxu0 %v2147
      %2167 = vmatprep.subr.bf16.mxu0 0
      %2168 = vmatpush1.bf16.msra.mxu0 %v2148
      %2169 = vmatprep.subr.bf16.mxu0 0
      %2170 = vmatpush1.bf16.msra.mxu0 %v2149
      %2171 = vmatprep.subr.bf16.mxu0 0
      %2172 = vmatpush1.bf16.msra.mxu0 %v2150
      %2173 = vmatprep.subr.bf16.mxu0 0
      %2174 = vmatpush1.bf16.msra.mxu0 %v2151
      %2175 = vmatprep.subr.bf16.mxu0 0
      %2176 = vmatpush1.bf16.msra.mxu0 %v2152
      %2177 = vmatprep.subr.bf16.mxu0 0
      %2178 = vmatpush1.bf16.msra.mxu0 0
      %2179 = vmatprep.subr.bf16.mxu0 0
      %2180 = vmatpush1.bf16.msra.mxu0 0
      %2181 = vmatprep.subr.bf16.mxu0 0
      %2182 = vmatpush1.bf16.msra.mxu0 0
      %2183 = vmatprep.subr.bf16.mxu0 0
      %2184 = vmatpush1.bf16.msra.mxu0 0
      %2185 = vmatprep.subr.bf16.mxu0 0
      %2186 = vmatpush1.bf16.msra.mxu0 0
      %2187 = vmatprep.subr.bf16.mxu0 0
      %2188 = vmatpush1.bf16.msra.mxu0 0
      %2189 = vmatprep.subr.bf16.mxu0 0
      %2190 = vmatpush1.bf16.msra.mxu0 0
      %2191 = vmatprep.subr.bf16.mxu0 0
      %2192 = vmatpush1.bf16.msra.mxu0 0
      %2193 = vmatprep.mubr.bf16.mxu0 0
      %2194 = vmatmul.mubr.bf16.gmra.mrb[0].mxu0 %v2089
      %v2195 = vpop.f32.mrb[0].mxu0
      %v2196 = vadd.f32 %v2111, %v2195
      %v2197 = vpop.f32.mrb[0].mxu0
      %v2198 = vpop.f32.mrb[0].mxu0
      %v2199 = vpop.f32.mrb[0].mxu0
      %2200 = vdwg.mxu0
      %2201 = vst [vmem:[#allocation13] sm:$0x3] %v2196
    $region53: #{tpu_custom_call.1} parent=1 // pred_fallthru
      _
    // Predicated region
    $region54: #{tpu_custom_call.1} parent=1 // pred_check
      _
    $region55: #{tpu_custom_call.1} parent=1 // pred_check_branch
      %2203 = sbr.rel (0) target = $region57
    $region56: #{tpu_custom_call.1} parent=1 // pred_region
      %s2205 = ssub.s32 32, 32
      %2206 = vsyncadd [#allocation7], %s2205
      %s2208 = sshll.u32 [#allocation13], 4
      %s2209 = int_to_ptr.vmem [resolvable:$true] %s2208
      %2211 = dma.vmem_to_hbm [thread:$0]  %s2209, 32, %s8, [#allocation7]
    $region57: #{tpu_custom_call.1} parent=1 // pred_fallthru
      _
    // Predicated region
    $region58: #{tpu_custom_call.1} parent=1 // pred_check
      _
    $region59: #{tpu_custom_call.1} parent=1 // pred_check_branch
      %2213 = sbr.rel (0) target = $region61
    $region60: #{tpu_custom_call.1} parent=1 // pred_region
      %2214 = dma.done [#allocation7], 32
    $region61: #{tpu_custom_call.1} parent=1 // pred_fallthru
      _
    %2215 = vsyncpa [#allocation6], 1
    %2216 = vsyncpa [#allocation9], 1
    %2217 = vsyncpa [#allocation12], 1
    %2218 = vsyncpa [#allocation7], 1

</llo_original>
